<compile_context>
chip_gen: v5e
topology: v5e:2x2
jax: 0.10.0
libtpu: 0.0.40
codegen_flags: <defaults>
</compile_context>

<pallas_src>
import jax
import jax.numpy as jnp
from jax.experimental import pallas as pl
from jax.experimental.pallas import tpu as pltpu

# ---- model hyper-params (match LSTMAcceptor.__init__ arguments) ----
VOCAB = 11        # vocab_size
EMB = 16          # embedding_dim
LSTM_DIM = 32     # lstm_dim
HIDDEN = 32       # hidden_dim
OUT = 4           # output_dim
N_LAYERS = 2      # n_layers
PAD_IDX = 0       # pad_idx
# dropout is declared in __init__ but unused in forward -> ignored.

B = 2             # batch
T = 8             # sequence length

H4 = 4 * LSTM_DIM            # 128 gate columns -> exactly one lane group
VPAD = 16                    # vocab padded to one 16-row bf16 sublane tile

# ---- bf16 weight-slab layout ([SLAB_ROWS, 256], all offsets 16-aligned) ----
R_PTAB = 0       # [VPAD, 128]  P = embedding @ wih0 + b0 (input-projection table)
R_WBIG = 16      # [64, 256]    cols 0:128 = [whh0; 0], cols 128:256 = [wih1; whh1]
R_WF1 = 80       # [32, 128]    fc1 weight (cols 0:HIDDEN used)
R_WF2 = 112      # [32, 128]    fc2 weight (cols 0:OUT used)
R_BIAS = 144     # row +0: b1, row +1: bf1, row +2: bf2 (cols 0:128)
SLAB_ROWS = 160
SLAB_COLS = 2 * H4           # 256


def lstm_acceptor_kernel(text_ref, w_ref, out_ref):
    """Masked 2-layer LSTM recurrence + fc1/tanh/fc2 head, fully in VMEM."""
    H = LSTM_DIM
    f32 = jnp.float32

    tok = text_ref[...]                                                # [B, T] int32

    # ---- lengths + validity mask computed in-kernel (no wrapper glue) ----
    lengths = jnp.sum((tok != PAD_IDX).astype(jnp.int32), axis=1,
                      keepdims=True)                                   # [B, 1]
    len_b = jnp.broadcast_to(lengths, (B, H))                          # [B, H]

    # ---- weights needed inside the recurrence (bf16, MXU-native) ----
    p_tab = w_ref[R_PTAB:R_PTAB + VPAD, 0:H4]                          # [16, 128] bf16
    w_big = w_ref[R_WBIG:R_WBIG + 2 * H, :]                            # [64, 256] bf16
    bias_blk = w_ref[R_BIAS:R_BIAS + 16, 0:H4].astype(f32)             # [16, 128] f32
    b1 = bias_blk[0:1, :]                                              # [1, 128]

    v_iota = jax.lax.broadcasted_iota(jnp.int32, (B, VPAD), 1)         # [B, 16]

    def cell_act(gates, c):
        # 2 full-vreg EUP passes instead of 4 partial-vreg ones.
        sig = jax.nn.sigmoid(gates)                                    # [B, 4H]
        tnh = jnp.tanh(gates)                                          # [B, 4H]
        i = sig[:, 0:H]
        f = sig[:, H:2 * H]
        o = sig[:, 3 * H:4 * H]
        g = tnh[:, 2 * H:3 * H]
        c_new = f * c + i * g
        return o * jnp.tanh(c_new), c_new

    z = jnp.zeros((B, H), f32)
    h0, c0, h1, c1 = z, z, z, z
    rec0 = jnp.zeros((B, H4), f32)         # h0(t-1) @ whh0; zero at t = 0

    # Fully unrolled recurrence (T is a static Python constant).
    # NOTE: concatenate / gate slices kept as-is; revisit (packed [B,64] state
    # via lane masks) only if a bundle dump shows them on the critical path.
    for t in range(T):
        keep = len_b > t                                               # [B, H] bool

        # layer-0 input projection for step t: one-hot row-select from the
        # P table (independent of recurrent state -> off the serial chain).
        oh = (tok[:, t:t + 1] == v_iota).astype(jnp.bfloat16)          # [B, 16]
        pre0_t = jnp.dot(oh, p_tab, preferred_element_type=f32)        # [B, 128]

        # layer-0 cell for step t (recurrent part came from last wavefront dot)
        g0 = pre0_t + rec0
        h0n, c0n = cell_act(g0, c0)
        h0 = jnp.where(keep, h0n, h0)
        c0 = jnp.where(keep, c0n, c0)

        # wavefront-fused matmul: the ONLY MXU issue on the serial chain.
        #   cols   0:128 -> h0(t) @ whh0                (layer-0 recurrence, t+1)
        #   cols 128:256 -> h0(t) @ wih1 + h1(t-1)@whh1 (layer-1 gates, t)
        xh = jnp.concatenate([h0, h1], axis=-1).astype(jnp.bfloat16)   # [B, 64]
        fused = jnp.dot(xh, w_big, preferred_element_type=f32)         # [B, 256]
        rec0 = fused[:, 0:H4]
        g1 = fused[:, H4:2 * H4] + b1

        # layer-1 cell for step t
        h1n, c1n = cell_act(g1, c1)
        h1 = jnp.where(keep, h1n, h1)
        c1 = jnp.where(keep, c1n, c1)

    # ---- head: fc1 -> tanh -> fc2 (weights loaded AFTER the hot loop) ----
    wf1 = w_ref[R_WF1:R_WF1 + H, 0:H4]                                 # [32, 128] bf16
    wf2 = w_ref[R_WF2:R_WF2 + HIDDEN, 0:H4]                            # [32, 128] bf16
    bf1 = bias_blk[1:2, :]
    bf2 = bias_blk[2:3, :]
    dense = jnp.tanh(jnp.dot(h1.astype(jnp.bfloat16), wf1,
                             preferred_element_type=f32) + bf1)        # [B, 128]
    out_ref[...] = jnp.dot(dense[:, 0:HIDDEN].astype(jnp.bfloat16), wf2,
                           preferred_element_type=f32) + bf2           # [B, 128]


def pack_weights(p):
    """Pack all weights into one [SLAB_ROWS, 256] bf16 slab (built in f32, cast once)."""
    slab = jnp.zeros((SLAB_ROWS, SLAB_COLS), jnp.float32)
    # layer-0 input projection table (embedding @ wih0 + b0), pad row -> b0 (masked anyway)
    ptab = p["embedding"] @ p["wih0"] + p["b0"]                        # [VOCAB, 128]
    slab = slab.at[R_PTAB:R_PTAB + VOCAB, 0:H4].set(ptab)
    # wavefront weight: [h0 | h1] @ W_big
    slab = slab.at[R_WBIG:R_WBIG + LSTM_DIM, 0:H4].set(p["whh0"])
    slab = slab.at[R_WBIG:R_WBIG + LSTM_DIM, H4:2 * H4].set(p["wih1"])
    slab = slab.at[R_WBIG + LSTM_DIM:R_WBIG + 2 * LSTM_DIM, H4:2 * H4].set(p["whh1"])
    # head
    slab = slab.at[R_WF1:R_WF1 + LSTM_DIM, 0:HIDDEN].set(p["wf1"])
    slab = slab.at[R_WF2:R_WF2 + HIDDEN, 0:OUT].set(p["wf2"])
    # biases
    slab = slab.at[R_BIAS + 0, 0:H4].set(p["b1"][0])
    slab = slab.at[R_BIAS + 1, 0:HIDDEN].set(p["bf1"][0])
    slab = slab.at[R_BIAS + 2, 0:OUT].set(p["bf2"][0])
    return slab.astype(jnp.bfloat16)


@jax.jit
def lstm_acceptor_forward(text, w_slab):
    """text: int32 [B, T] token ids; w_slab: bf16 [160, 256]. Returns f32 [B, OUT]."""
    vmem = pl.BlockSpec(memory_space=pltpu.MemorySpace.VMEM)
    out_pad = pl.pallas_call(
        lstm_acceptor_kernel,
        out_shape=jax.ShapeDtypeStruct((B, H4), jnp.float32),
        in_specs=[vmem, vmem],
        out_specs=vmem,
    )(text.astype(jnp.int32), w_slab)
    return out_pad[:, :OUT]


def reference_forward(text, params):
    """Pure-JAX f32 reference with identical packed-LSTM semantics."""
    H = LSTM_DIM
    lengths = jnp.sum((text != PAD_IDX).astype(jnp.int32), axis=1)
    emb = params["embedding"][text].astype(jnp.float32)               # [B, T, E]

    def cell(x, h, c, wih, whh, b):
        gates = x @ wih + h @ whh + b
        i = jax.nn.sigmoid(gates[:, 0:H])
        f = jax.nn.sigmoid(gates[:, H:2 * H])
        g = jnp.tanh(gates[:, 2 * H:3 * H])
        o = jax.nn.sigmoid(gates[:, 3 * H:4 * H])
        c = f * c + i * g
        return o * jnp.tanh(c), c

    z = jnp.zeros((B, H), jnp.float32)
    h0, c0, h1, c1 = z, z, z, z
    for t in range(T):
        m = (lengths > t)[:, None]
        h0n, c0n = cell(emb[:, t], h0, c0, params["wih0"], params["whh0"], params["b0"])
        h0 = jnp.where(m, h0n, h0)
        c0 = jnp.where(m, c0n, c0)
        h1n, c1n = cell(h0, h1, c1, params["wih1"], params["whh1"], params["b1"])
        h1 = jnp.where(m, h1n, h1)
        c1 = jnp.where(m, c1n, c1)
    dense = jnp.tanh(h1 @ params["wf1"] + params["bf1"])
    return dense @ params["wf2"] + params["bf2"]


def init_params(key):
    ks = jax.random.split(key, 12)
    s = 0.1
    emb = jax.random.normal(ks[0], (VOCAB, EMB), jnp.float32) * s
    emb = emb.at[PAD_IDX].set(0.0)  # padding_idx row is zero in nn.Embedding
    p = {
        "embedding": emb,
        # layer 0: input dim = EMB; gate order [i, f, g, o]; b = b_ih + b_hh
        "wih0": jax.random.normal(ks[1], (EMB, H4), jnp.float32) * s,
        "whh0": jax.random.normal(ks[2], (LSTM_DIM, H4), jnp.float32) * s,
        "b0":   jax.random.normal(ks[3], (1, H4), jnp.float32) * s,
        # layer 1: input dim = LSTM_DIM
        "wih1": jax.random.normal(ks[4], (LSTM_DIM, H4), jnp.float32) * s,
        "whh1": jax.random.normal(ks[5], (LSTM_DIM, H4), jnp.float32) * s,
        "b1":   jax.random.normal(ks[6], (1, H4), jnp.float32) * s,
        # fc1 / fc2 (stored transposed for x @ W^T)
        "wf1":  jax.random.normal(ks[7], (LSTM_DIM, HIDDEN), jnp.float32) * s,
        "bf1":  jax.random.normal(ks[8], (1, HIDDEN), jnp.float32) * s,
        "wf2":  jax.random.normal(ks[9], (HIDDEN, OUT), jnp.float32) * s,
        "bf2":  jax.random.normal(ks[10], (1, OUT), jnp.float32) * s,
    }
    p["w_slab"] = pack_weights(p)   # single packed bf16 operand for the kernel
    return p


if __name__ == "__main__":
    key = jax.random.PRNGKey(0)
    pkey, tkey = jax.random.split(key)
    params = init_params(pkey)

    # token ids in [1, VOCAB), with trailing padding -> variable lengths (>= 1)
    text = jax.random.randint(tkey, (B, T), 1, VOCAB, dtype=jnp.int32)
    text = text.at[0, 6:].set(PAD_IDX)   # length 6
    text = text.at[1, 4:].set(PAD_IDX)   # length 4

    out = lstm_acceptor_forward(text, params["w_slab"])
    jax.block_until_ready(out)
    assert out.shape == (B, OUT) and out.dtype == jnp.float32

    ref = reference_forward(text, params)
    err = float(jnp.max(jnp.abs(out - ref)))
    # Tolerance covers bf16 MXU inputs (f32 accumulation); expected |err| ~ 1e-3
    # at these weight scales.
    assert err < 1e-2, f"kernel mismatch vs pure-JAX f32 reference: {err}"
    print("KERNEL_OK")
</pallas_src>

<mosaic_0001>
module attributes {stable_mosaic.version = 11 : i64} {
  func.func @lstm_acceptor_kernel(%arg0: memref<2x8xi32, #tpu.memory_space<vmem>>, %arg1: memref<160x256xbf16, #tpu.memory_space<vmem>>, %arg2: memref<2x128xf32, #tpu.memory_space<vmem>>) attributes {dimension_semantics = [], scalar_prefetch = 0 : i64, scratch_operands = 0 : i64, tpu.core_type = #tpu.core_type<tc>} {
    %c0 = arith.constant 0 : index
    %c0_0 = arith.constant 0 : index
    %0 = vector.load %arg0[%c0, %c0_0] : memref<2x8xi32, #tpu.memory_space<vmem>>, vector<2x8xi32>
    %c0_i32 = arith.constant 0 : i32
    %1 = vector.broadcast %c0_i32 : i32 to vector<2x8xi32>
    %2 = arith.cmpi ne, %0, %1 : vector<2x8xi32>
    %3 = arith.extui %2 : vector<2x8xi1> to vector<2x8xi32>
    %cst = arith.constant dense<0> : vector<2xi32>
    %4 = vector.multi_reduction <add>, %3, %cst [1] : vector<2x8xi32> to vector<2xi32>
    %5 = vector.shape_cast %4 : vector<2xi32> to vector<2x1xi32>
    %6 = vector.shape_cast %5 : vector<2x1xi32> to vector<2x1xi32>
    %7 = vector.broadcast %6 : vector<2x1xi32> to vector<2x32xi32>
    %c0_1 = arith.constant 0 : index
    %c0_2 = arith.constant 0 : index
    %8 = vector.load %arg1[%c0_1, %c0_2] : memref<160x256xbf16, #tpu.memory_space<vmem>>, vector<16x128xbf16>
    %c16 = arith.constant 16 : index
    %c0_3 = arith.constant 0 : index
    %9 = vector.load %arg1[%c16, %c0_3] : memref<160x256xbf16, #tpu.memory_space<vmem>>, vector<64x256xbf16>
    %c144 = arith.constant 144 : index
    %c0_4 = arith.constant 0 : index
    %10 = vector.load %arg1[%c144, %c0_4] : memref<160x256xbf16, #tpu.memory_space<vmem>>, vector<16x128xbf16>
    %11 = arith.extf %10 : vector<16x128xbf16> to vector<16x128xf32>
    %12 = vector.extract_strided_slice %11 {offsets = [0, 0], sizes = [1, 128], strides = [1, 1]} : vector<16x128xf32> to vector<1x128xf32>
    %13 = tpu.iota {dimensions = array<i32: 1>} : vector<2x16xi32>
    %cst_5 = arith.constant 0.000000e+00 : f32
    %14 = vector.broadcast %cst_5 : f32 to vector<2x32xf32>
    %cst_6 = arith.constant 0.000000e+00 : f32
    %15 = vector.broadcast %cst_6 : f32 to vector<2x128xf32>
    %c0_i32_7 = arith.constant 0 : i32
    %16 = vector.broadcast %c0_i32_7 : i32 to vector<2x32xi32>
    %17 = arith.cmpi sgt, %7, %16 : vector<2x32xi32>
    %18 = vector.extract_strided_slice %0 {offsets = [0, 0], sizes = [2, 1], strides = [1, 1]} : vector<2x8xi32> to vector<2x1xi32>
    %19 = vector.broadcast %18 : vector<2x1xi32> to vector<2x16xi32>
    %20 = arith.cmpi eq, %19, %13 : vector<2x16xi32>
    %21 = arith.extui %20 : vector<2x16xi1> to vector<2x16xi32>
    %22 = arith.sitofp %21 : vector<2x16xi32> to vector<2x16xf32>
    %23 = arith.truncf %22 : vector<2x16xf32> to vector<2x16xbf16>
    %cst_8 = arith.constant dense<0.000000e+00> : vector<2x128xf32>
    %24 = tpu.matmul %23, %8, %cst_8 {dimension_numbers = #tpu.dot_dimension_numbers<[1], [0], [0], [1], [0, 0, 1, 1], [], []>} : vector<2x16xbf16>, vector<16x128xbf16>, vector<2x128xf32> -> vector<2x128xf32>
    %25 = arith.addf %24, %15 : vector<2x128xf32>
    %26 = arith.negf %25 : vector<2x128xf32>
    %27 = math.exp %26 : vector<2x128xf32>
    %cst_9 = arith.constant 1.000000e+00 : f32
    %28 = vector.broadcast %cst_9 : f32 to vector<2x128xf32>
    %29 = arith.addf %28, %27 : vector<2x128xf32>
    %30 = arith.divf %28, %29 : vector<2x128xf32>
    %31 = math.tanh %25 : vector<2x128xf32>
    %32 = vector.extract_strided_slice %30 {offsets = [0, 0], sizes = [2, 32], strides = [1, 1]} : vector<2x128xf32> to vector<2x32xf32>
    %33 = vector.extract_strided_slice %30 {offsets = [0, 32], sizes = [2, 32], strides = [1, 1]} : vector<2x128xf32> to vector<2x32xf32>
    %34 = vector.extract_strided_slice %30 {offsets = [0, 96], sizes = [2, 32], strides = [1, 1]} : vector<2x128xf32> to vector<2x32xf32>
    %35 = vector.extract_strided_slice %31 {offsets = [0, 64], sizes = [2, 32], strides = [1, 1]} : vector<2x128xf32> to vector<2x32xf32>
    %36 = arith.mulf %33, %14 : vector<2x32xf32>
    %37 = arith.mulf %32, %35 : vector<2x32xf32>
    %38 = arith.addf %36, %37 : vector<2x32xf32>
    %39 = math.tanh %38 : vector<2x32xf32>
    %40 = arith.mulf %34, %39 : vector<2x32xf32>
    %41 = arith.select %17, %40, %14 : vector<2x32xi1>, vector<2x32xf32>
    %42 = arith.select %17, %38, %14 : vector<2x32xi1>, vector<2x32xf32>
    %43 = tpu.concatenate %41, %14 in 1 : vector<2x32xf32>, vector<2x32xf32> -> vector<2x64xf32>
    %44 = arith.truncf %43 : vector<2x64xf32> to vector<2x64xbf16>
    %cst_10 = arith.constant dense<0.000000e+00> : vector<2x256xf32>
    %45 = tpu.matmul %44, %9, %cst_10 {dimension_numbers = #tpu.dot_dimension_numbers<[1], [0], [0], [1], [0, 0, 1, 1], [], []>} : vector<2x64xbf16>, vector<64x256xbf16>, vector<2x256xf32> -> vector<2x256xf32>
    %46 = vector.extract_strided_slice %45 {offsets = [0, 0], sizes = [2, 128], strides = [1, 1]} : vector<2x256xf32> to vector<2x128xf32>
    %47 = vector.extract_strided_slice %45 {offsets = [0, 128], sizes = [2, 128], strides = [1, 1]} : vector<2x256xf32> to vector<2x128xf32>
    %48 = vector.broadcast %12 : vector<1x128xf32> to vector<2x128xf32>
    %49 = arith.addf %47, %48 : vector<2x128xf32>
    %50 = arith.negf %49 : vector<2x128xf32>
    %51 = math.exp %50 : vector<2x128xf32>
    %cst_11 = arith.constant 1.000000e+00 : f32
    %52 = vector.broadcast %cst_11 : f32 to vector<2x128xf32>
    %53 = arith.addf %52, %51 : vector<2x128xf32>
    %54 = arith.divf %52, %53 : vector<2x128xf32>
    %55 = math.tanh %49 : vector<2x128xf32>
    %56 = vector.extract_strided_slice %54 {offsets = [0, 0], sizes = [2, 32], strides = [1, 1]} : vector<2x128xf32> to vector<2x32xf32>
    %57 = vector.extract_strided_slice %54 {offsets = [0, 32], sizes = [2, 32], strides = [1, 1]} : vector<2x128xf32> to vector<2x32xf32>
    %58 = vector.extract_strided_slice %54 {offsets = [0, 96], sizes = [2, 32], strides = [1, 1]} : vector<2x128xf32> to vector<2x32xf32>
    %59 = vector.extract_strided_slice %55 {offsets = [0, 64], sizes = [2, 32], strides = [1, 1]} : vector<2x128xf32> to vector<2x32xf32>
    %60 = arith.mulf %57, %14 : vector<2x32xf32>
    %61 = arith.mulf %56, %59 : vector<2x32xf32>
    %62 = arith.addf %60, %61 : vector<2x32xf32>
    %63 = math.tanh %62 : vector<2x32xf32>
    %64 = arith.mulf %58, %63 : vector<2x32xf32>
    %65 = arith.select %17, %64, %14 : vector<2x32xi1>, vector<2x32xf32>
    %66 = arith.select %17, %62, %14 : vector<2x32xi1>, vector<2x32xf32>
    %c1_i32 = arith.constant 1 : i32
    %67 = vector.broadcast %c1_i32 : i32 to vector<2x32xi32>
    %68 = arith.cmpi sgt, %7, %67 : vector<2x32xi32>
    %69 = vector.extract_strided_slice %0 {offsets = [0, 1], sizes = [2, 1], strides = [1, 1]} : vector<2x8xi32> to vector<2x1xi32>
    %70 = vector.broadcast %69 : vector<2x1xi32> to vector<2x16xi32>
    %71 = arith.cmpi eq, %70, %13 : vector<2x16xi32>
    %72 = arith.extui %71 : vector<2x16xi1> to vector<2x16xi32>
    %73 = arith.sitofp %72 : vector<2x16xi32> to vector<2x16xf32>
    %74 = arith.truncf %73 : vector<2x16xf32> to vector<2x16xbf16>
    %cst_12 = arith.constant dense<0.000000e+00> : vector<2x128xf32>
    %75 = tpu.matmul %74, %8, %cst_12 {dimension_numbers = #tpu.dot_dimension_numbers<[1], [0], [0], [1], [0, 0, 1, 1], [], []>} : vector<2x16xbf16>, vector<16x128xbf16>, vector<2x128xf32> -> vector<2x128xf32>
    %76 = arith.addf %75, %46 : vector<2x128xf32>
    %77 = arith.negf %76 : vector<2x128xf32>
    %78 = math.exp %77 : vector<2x128xf32>
    %cst_13 = arith.constant 1.000000e+00 : f32
    %79 = vector.broadcast %cst_13 : f32 to vector<2x128xf32>
    %80 = arith.addf %79, %78 : vector<2x128xf32>
    %81 = arith.divf %79, %80 : vector<2x128xf32>
    %82 = math.tanh %76 : vector<2x128xf32>
    %83 = vector.extract_strided_slice %81 {offsets = [0, 0], sizes = [2, 32], strides = [1, 1]} : vector<2x128xf32> to vector<2x32xf32>
    %84 = vector.extract_strided_slice %81 {offsets = [0, 32], sizes = [2, 32], strides = [1, 1]} : vector<2x128xf32> to vector<2x32xf32>
    %85 = vector.extract_strided_slice %81 {offsets = [0, 96], sizes = [2, 32], strides = [1, 1]} : vector<2x128xf32> to vector<2x32xf32>
    %86 = vector.extract_strided_slice %82 {offsets = [0, 64], sizes = [2, 32], strides = [1, 1]} : vector<2x128xf32> to vector<2x32xf32>
    %87 = arith.mulf %84, %42 : vector<2x32xf32>
    %88 = arith.mulf %83, %86 : vector<2x32xf32>
    %89 = arith.addf %87, %88 : vector<2x32xf32>
    %90 = math.tanh %89 : vector<2x32xf32>
    %91 = arith.mulf %85, %90 : vector<2x32xf32>
    %92 = arith.select %68, %91, %41 : vector<2x32xi1>, vector<2x32xf32>
    %93 = arith.select %68, %89, %42 : vector<2x32xi1>, vector<2x32xf32>
    %94 = tpu.concatenate %92, %65 in 1 : vector<2x32xf32>, vector<2x32xf32> -> vector<2x64xf32>
    %95 = arith.truncf %94 : vector<2x64xf32> to vector<2x64xbf16>
    %cst_14 = arith.constant dense<0.000000e+00> : vector<2x256xf32>
    %96 = tpu.matmul %95, %9, %cst_14 {dimension_numbers = #tpu.dot_dimension_numbers<[1], [0], [0], [1], [0, 0, 1, 1], [], []>} : vector<2x64xbf16>, vector<64x256xbf16>, vector<2x256xf32> -> vector<2x256xf32>
    %97 = vector.extract_strided_slice %96 {offsets = [0, 0], sizes = [2, 128], strides = [1, 1]} : vector<2x256xf32> to vector<2x128xf32>
    %98 = vector.extract_strided_slice %96 {offsets = [0, 128], sizes = [2, 128], strides = [1, 1]} : vector<2x256xf32> to vector<2x128xf32>
    %99 = vector.broadcast %12 : vector<1x128xf32> to vector<2x128xf32>
    %100 = arith.addf %98, %99 : vector<2x128xf32>
    %101 = arith.negf %100 : vector<2x128xf32>
    %102 = math.exp %101 : vector<2x128xf32>
    %cst_15 = arith.constant 1.000000e+00 : f32
    %103 = vector.broadcast %cst_15 : f32 to vector<2x128xf32>
    %104 = arith.addf %103, %102 : vector<2x128xf32>
    %105 = arith.divf %103, %104 : vector<2x128xf32>
    %106 = math.tanh %100 : vector<2x128xf32>
    %107 = vector.extract_strided_slice %105 {offsets = [0, 0], sizes = [2, 32], strides = [1, 1]} : vector<2x128xf32> to vector<2x32xf32>
    %108 = vector.extract_strided_slice %105 {offsets = [0, 32], sizes = [2, 32], strides = [1, 1]} : vector<2x128xf32> to vector<2x32xf32>
    %109 = vector.extract_strided_slice %105 {offsets = [0, 96], sizes = [2, 32], strides = [1, 1]} : vector<2x128xf32> to vector<2x32xf32>
    %110 = vector.extract_strided_slice %106 {offsets = [0, 64], sizes = [2, 32], strides = [1, 1]} : vector<2x128xf32> to vector<2x32xf32>
    %111 = arith.mulf %108, %66 : vector<2x32xf32>
    %112 = arith.mulf %107, %110 : vector<2x32xf32>
    %113 = arith.addf %111, %112 : vector<2x32xf32>
    %114 = math.tanh %113 : vector<2x32xf32>
    %115 = arith.mulf %109, %114 : vector<2x32xf32>
    %116 = arith.select %68, %115, %65 : vector<2x32xi1>, vector<2x32xf32>
    %117 = arith.select %68, %113, %66 : vector<2x32xi1>, vector<2x32xf32>
    %c2_i32 = arith.constant 2 : i32
    %118 = vector.broadcast %c2_i32 : i32 to vector<2x32xi32>
    %119 = arith.cmpi sgt, %7, %118 : vector<2x32xi32>
    %120 = vector.extract_strided_slice %0 {offsets = [0, 2], sizes = [2, 1], strides = [1, 1]} : vector<2x8xi32> to vector<2x1xi32>
    %121 = vector.broadcast %120 : vector<2x1xi32> to vector<2x16xi32>
    %122 = arith.cmpi eq, %121, %13 : vector<2x16xi32>
    %123 = arith.extui %122 : vector<2x16xi1> to vector<2x16xi32>
    %124 = arith.sitofp %123 : vector<2x16xi32> to vector<2x16xf32>
    %125 = arith.truncf %124 : vector<2x16xf32> to vector<2x16xbf16>
    %cst_16 = arith.constant dense<0.000000e+00> : vector<2x128xf32>
    %126 = tpu.matmul %125, %8, %cst_16 {dimension_numbers = #tpu.dot_dimension_numbers<[1], [0], [0], [1], [0, 0, 1, 1], [], []>} : vector<2x16xbf16>, vector<16x128xbf16>, vector<2x128xf32> -> vector<2x128xf32>
    %127 = arith.addf %126, %97 : vector<2x128xf32>
    %128 = arith.negf %127 : vector<2x128xf32>
    %129 = math.exp %128 : vector<2x128xf32>
    %cst_17 = arith.constant 1.000000e+00 : f32
    %130 = vector.broadcast %cst_17 : f32 to vector<2x128xf32>
    %131 = arith.addf %130, %129 : vector<2x128xf32>
    %132 = arith.divf %130, %131 : vector<2x128xf32>
    %133 = math.tanh %127 : vector<2x128xf32>
    %134 = vector.extract_strided_slice %132 {offsets = [0, 0], sizes = [2, 32], strides = [1, 1]} : vector<2x128xf32> to vector<2x32xf32>
    %135 = vector.extract_strided_slice %132 {offsets = [0, 32], sizes = [2, 32], strides = [1, 1]} : vector<2x128xf32> to vector<2x32xf32>
    %136 = vector.extract_strided_slice %132 {offsets = [0, 96], sizes = [2, 32], strides = [1, 1]} : vector<2x128xf32> to vector<2x32xf32>
    %137 = vector.extract_strided_slice %133 {offsets = [0, 64], sizes = [2, 32], strides = [1, 1]} : vector<2x128xf32> to vector<2x32xf32>
    %138 = arith.mulf %135, %93 : vector<2x32xf32>
    %139 = arith.mulf %134, %137 : vector<2x32xf32>
    %140 = arith.addf %138, %139 : vector<2x32xf32>
    %141 = math.tanh %140 : vector<2x32xf32>
    %142 = arith.mulf %136, %141 : vector<2x32xf32>
    %143 = arith.select %119, %142, %92 : vector<2x32xi1>, vector<2x32xf32>
    %144 = arith.select %119, %140, %93 : vector<2x32xi1>, vector<2x32xf32>
    %145 = tpu.concatenate %143, %116 in 1 : vector<2x32xf32>, vector<2x32xf32> -> vector<2x64xf32>
    %146 = arith.truncf %145 : vector<2x64xf32> to vector<2x64xbf16>
    %cst_18 = arith.constant dense<0.000000e+00> : vector<2x256xf32>
    %147 = tpu.matmul %146, %9, %cst_18 {dimension_numbers = #tpu.dot_dimension_numbers<[1], [0], [0], [1], [0, 0, 1, 1], [], []>} : vector<2x64xbf16>, vector<64x256xbf16>, vector<2x256xf32> -> vector<2x256xf32>
    %148 = vector.extract_strided_slice %147 {offsets = [0, 0], sizes = [2, 128], strides = [1, 1]} : vector<2x256xf32> to vector<2x128xf32>
    %149 = vector.extract_strided_slice %147 {offsets = [0, 128], sizes = [2, 128], strides = [1, 1]} : vector<2x256xf32> to vector<2x128xf32>
    %150 = vector.broadcast %12 : vector<1x128xf32> to vector<2x128xf32>
    %151 = arith.addf %149, %150 : vector<2x128xf32>
    %152 = arith.negf %151 : vector<2x128xf32>
    %153 = math.exp %152 : vector<2x128xf32>
    %cst_19 = arith.constant 1.000000e+00 : f32
    %154 = vector.broadcast %cst_19 : f32 to vector<2x128xf32>
    %155 = arith.addf %154, %153 : vector<2x128xf32>
    %156 = arith.divf %154, %155 : vector<2x128xf32>
    %157 = math.tanh %151 : vector<2x128xf32>
    %158 = vector.extract_strided_slice %156 {offsets = [0, 0], sizes = [2, 32], strides = [1, 1]} : vector<2x128xf32> to vector<2x32xf32>
    %159 = vector.extract_strided_slice %156 {offsets = [0, 32], sizes = [2, 32], strides = [1, 1]} : vector<2x128xf32> to vector<2x32xf32>
    %160 = vector.extract_strided_slice %156 {offsets = [0, 96], sizes = [2, 32], strides = [1, 1]} : vector<2x128xf32> to vector<2x32xf32>
    %161 = vector.extract_strided_slice %157 {offsets = [0, 64], sizes = [2, 32], strides = [1, 1]} : vector<2x128xf32> to vector<2x32xf32>
    %162 = arith.mulf %159, %117 : vector<2x32xf32>
    %163 = arith.mulf %158, %161 : vector<2x32xf32>
    %164 = arith.addf %162, %163 : vector<2x32xf32>
    %165 = math.tanh %164 : vector<2x32xf32>
    %166 = arith.mulf %160, %165 : vector<2x32xf32>
    %167 = arith.select %119, %166, %116 : vector<2x32xi1>, vector<2x32xf32>
    %168 = arith.select %119, %164, %117 : vector<2x32xi1>, vector<2x32xf32>
    %c3_i32 = arith.constant 3 : i32
    %169 = vector.broadcast %c3_i32 : i32 to vector<2x32xi32>
    %170 = arith.cmpi sgt, %7, %169 : vector<2x32xi32>
    %171 = vector.extract_strided_slice %0 {offsets = [0, 3], sizes = [2, 1], strides = [1, 1]} : vector<2x8xi32> to vector<2x1xi32>
    %172 = vector.broadcast %171 : vector<2x1xi32> to vector<2x16xi32>
    %173 = arith.cmpi eq, %172, %13 : vector<2x16xi32>
    %174 = arith.extui %173 : vector<2x16xi1> to vector<2x16xi32>
    %175 = arith.sitofp %174 : vector<2x16xi32> to vector<2x16xf32>
    %176 = arith.truncf %175 : vector<2x16xf32> to vector<2x16xbf16>
    %cst_20 = arith.constant dense<0.000000e+00> : vector<2x128xf32>
    %177 = tpu.matmul %176, %8, %cst_20 {dimension_numbers = #tpu.dot_dimension_numbers<[1], [0], [0], [1], [0, 0, 1, 1], [], []>} : vector<2x16xbf16>, vector<16x128xbf16>, vector<2x128xf32> -> vector<2x128xf32>
    %178 = arith.addf %177, %148 : vector<2x128xf32>
    %179 = arith.negf %178 : vector<2x128xf32>
    %180 = math.exp %179 : vector<2x128xf32>
    %cst_21 = arith.constant 1.000000e+00 : f32
    %181 = vector.broadcast %cst_21 : f32 to vector<2x128xf32>
    %182 = arith.addf %181, %180 : vector<2x128xf32>
    %183 = arith.divf %181, %182 : vector<2x128xf32>
    %184 = math.tanh %178 : vector<2x128xf32>
    %185 = vector.extract_strided_slice %183 {offsets = [0, 0], sizes = [2, 32], strides = [1, 1]} : vector<2x128xf32> to vector<2x32xf32>
    %186 = vector.extract_strided_slice %183 {offsets = [0, 32], sizes = [2, 32], strides = [1, 1]} : vector<2x128xf32> to vector<2x32xf32>
    %187 = vector.extract_strided_slice %183 {offsets = [0, 96], sizes = [2, 32], strides = [1, 1]} : vector<2x128xf32> to vector<2x32xf32>
    %188 = vector.extract_strided_slice %184 {offsets = [0, 64], sizes = [2, 32], strides = [1, 1]} : vector<2x128xf32> to vector<2x32xf32>
    %189 = arith.mulf %186, %144 : vector<2x32xf32>
    %190 = arith.mulf %185, %188 : vector<2x32xf32>
    %191 = arith.addf %189, %190 : vector<2x32xf32>
    %192 = math.tanh %191 : vector<2x32xf32>
    %193 = arith.mulf %187, %192 : vector<2x32xf32>
    %194 = arith.select %170, %193, %143 : vector<2x32xi1>, vector<2x32xf32>
    %195 = arith.select %170, %191, %144 : vector<2x32xi1>, vector<2x32xf32>
    %196 = tpu.concatenate %194, %167 in 1 : vector<2x32xf32>, vector<2x32xf32> -> vector<2x64xf32>
    %197 = arith.truncf %196 : vector<2x64xf32> to vector<2x64xbf16>
    %cst_22 = arith.constant dense<0.000000e+00> : vector<2x256xf32>
    %198 = tpu.matmul %197, %9, %cst_22 {dimension_numbers = #tpu.dot_dimension_numbers<[1], [0], [0], [1], [0, 0, 1, 1], [], []>} : vector<2x64xbf16>, vector<64x256xbf16>, vector<2x256xf32> -> vector<2x256xf32>
    %199 = vector.extract_strided_slice %198 {offsets = [0, 0], sizes = [2, 128], strides = [1, 1]} : vector<2x256xf32> to vector<2x128xf32>
    %200 = vector.extract_strided_slice %198 {offsets = [0, 128], sizes = [2, 128], strides = [1, 1]} : vector<2x256xf32> to vector<2x128xf32>
    %201 = vector.broadcast %12 : vector<1x128xf32> to vector<2x128xf32>
    %202 = arith.addf %200, %201 : vector<2x128xf32>
    %203 = arith.negf %202 : vector<2x128xf32>
    %204 = math.exp %203 : vector<2x128xf32>
    %cst_23 = arith.constant 1.000000e+00 : f32
    %205 = vector.broadcast %cst_23 : f32 to vector<2x128xf32>
    %206 = arith.addf %205, %204 : vector<2x128xf32>
    %207 = arith.divf %205, %206 : vector<2x128xf32>
    %208 = math.tanh %202 : vector<2x128xf32>
    %209 = vector.extract_strided_slice %207 {offsets = [0, 0], sizes = [2, 32], strides = [1, 1]} : vector<2x128xf32> to vector<2x32xf32>
    %210 = vector.extract_strided_slice %207 {offsets = [0, 32], sizes = [2, 32], strides = [1, 1]} : vector<2x128xf32> to vector<2x32xf32>
    %211 = vector.extract_strided_slice %207 {offsets = [0, 96], sizes = [2, 32], strides = [1, 1]} : vector<2x128xf32> to vector<2x32xf32>
    %212 = vector.extract_strided_slice %208 {offsets = [0, 64], sizes = [2, 32], strides = [1, 1]} : vector<2x128xf32> to vector<2x32xf32>
    %213 = arith.mulf %210, %168 : vector<2x32xf32>
    %214 = arith.mulf %209, %212 : vector<2x32xf32>
    %215 = arith.addf %213, %214 : vector<2x32xf32>
    %216 = math.tanh %215 : vector<2x32xf32>
    %217 = arith.mulf %211, %216 : vector<2x32xf32>
    %218 = arith.select %170, %217, %167 : vector<2x32xi1>, vector<2x32xf32>
    %219 = arith.select %170, %215, %168 : vector<2x32xi1>, vector<2x32xf32>
    %c4_i32 = arith.constant 4 : i32
    %220 = vector.broadcast %c4_i32 : i32 to vector<2x32xi32>
    %221 = arith.cmpi sgt, %7, %220 : vector<2x32xi32>
    %222 = vector.extract_strided_slice %0 {offsets = [0, 4], sizes = [2, 1], strides = [1, 1]} : vector<2x8xi32> to vector<2x1xi32>
    %223 = vector.broadcast %222 : vector<2x1xi32> to vector<2x16xi32>
    %224 = arith.cmpi eq, %223, %13 : vector<2x16xi32>
    %225 = arith.extui %224 : vector<2x16xi1> to vector<2x16xi32>
    %226 = arith.sitofp %225 : vector<2x16xi32> to vector<2x16xf32>
    %227 = arith.truncf %226 : vector<2x16xf32> to vector<2x16xbf16>
    %cst_24 = arith.constant dense<0.000000e+00> : vector<2x128xf32>
    %228 = tpu.matmul %227, %8, %cst_24 {dimension_numbers = #tpu.dot_dimension_numbers<[1], [0], [0], [1], [0, 0, 1, 1], [], []>} : vector<2x16xbf16>, vector<16x128xbf16>, vector<2x128xf32> -> vector<2x128xf32>
    %229 = arith.addf %228, %199 : vector<2x128xf32>
    %230 = arith.negf %229 : vector<2x128xf32>
    %231 = math.exp %230 : vector<2x128xf32>
    %cst_25 = arith.constant 1.000000e+00 : f32
    %232 = vector.broadcast %cst_25 : f32 to vector<2x128xf32>
    %233 = arith.addf %232, %231 : vector<2x128xf32>
    %234 = arith.divf %232, %233 : vector<2x128xf32>
    %235 = math.tanh %229 : vector<2x128xf32>
    %236 = vector.extract_strided_slice %234 {offsets = [0, 0], sizes = [2, 32], strides = [1, 1]} : vector<2x128xf32> to vector<2x32xf32>
    %237 = vector.extract_strided_slice %234 {offsets = [0, 32], sizes = [2, 32], strides = [1, 1]} : vector<2x128xf32> to vector<2x32xf32>
    %238 = vector.extract_strided_slice %234 {offsets = [0, 96], sizes = [2, 32], strides = [1, 1]} : vector<2x128xf32> to vector<2x32xf32>
    %239 = vector.extract_strided_slice %235 {offsets = [0, 64], sizes = [2, 32], strides = [1, 1]} : vector<2x128xf32> to vector<2x32xf32>
    %240 = arith.mulf %237, %195 : vector<2x32xf32>
    %241 = arith.mulf %236, %239 : vector<2x32xf32>
    %242 = arith.addf %240, %241 : vector<2x32xf32>
    %243 = math.tanh %242 : vector<2x32xf32>
    %244 = arith.mulf %238, %243 : vector<2x32xf32>
    %245 = arith.select %221, %244, %194 : vector<2x32xi1>, vector<2x32xf32>
    %246 = arith.select %221, %242, %195 : vector<2x32xi1>, vector<2x32xf32>
    %247 = tpu.concatenate %245, %218 in 1 : vector<2x32xf32>, vector<2x32xf32> -> vector<2x64xf32>
    %248 = arith.truncf %247 : vector<2x64xf32> to vector<2x64xbf16>
    %cst_26 = arith.constant dense<0.000000e+00> : vector<2x256xf32>
    %249 = tpu.matmul %248, %9, %cst_26 {dimension_numbers = #tpu.dot_dimension_numbers<[1], [0], [0], [1], [0, 0, 1, 1], [], []>} : vector<2x64xbf16>, vector<64x256xbf16>, vector<2x256xf32> -> vector<2x256xf32>
    %250 = vector.extract_strided_slice %249 {offsets = [0, 0], sizes = [2, 128], strides = [1, 1]} : vector<2x256xf32> to vector<2x128xf32>
    %251 = vector.extract_strided_slice %249 {offsets = [0, 128], sizes = [2, 128], strides = [1, 1]} : vector<2x256xf32> to vector<2x128xf32>
    %252 = vector.broadcast %12 : vector<1x128xf32> to vector<2x128xf32>
    %253 = arith.addf %251, %252 : vector<2x128xf32>
    %254 = arith.negf %253 : vector<2x128xf32>
    %255 = math.exp %254 : vector<2x128xf32>
    %cst_27 = arith.constant 1.000000e+00 : f32
    %256 = vector.broadcast %cst_27 : f32 to vector<2x128xf32>
    %257 = arith.addf %256, %255 : vector<2x128xf32>
    %258 = arith.divf %256, %257 : vector<2x128xf32>
    %259 = math.tanh %253 : vector<2x128xf32>
    %260 = vector.extract_strided_slice %258 {offsets = [0, 0], sizes = [2, 32], strides = [1, 1]} : vector<2x128xf32> to vector<2x32xf32>
    %261 = vector.extract_strided_slice %258 {offsets = [0, 32], sizes = [2, 32], strides = [1, 1]} : vector<2x128xf32> to vector<2x32xf32>
    %262 = vector.extract_strided_slice %258 {offsets = [0, 96], sizes = [2, 32], strides = [1, 1]} : vector<2x128xf32> to vector<2x32xf32>
    %263 = vector.extract_strided_slice %259 {offsets = [0, 64], sizes = [2, 32], strides = [1, 1]} : vector<2x128xf32> to vector<2x32xf32>
    %264 = arith.mulf %261, %219 : vector<2x32xf32>
    %265 = arith.mulf %260, %263 : vector<2x32xf32>
    %266 = arith.addf %264, %265 : vector<2x32xf32>
    %267 = math.tanh %266 : vector<2x32xf32>
    %268 = arith.mulf %262, %267 : vector<2x32xf32>
    %269 = arith.select %221, %268, %218 : vector<2x32xi1>, vector<2x32xf32>
    %270 = arith.select %221, %266, %219 : vector<2x32xi1>, vector<2x32xf32>
    %c5_i32 = arith.constant 5 : i32
    %271 = vector.broadcast %c5_i32 : i32 to vector<2x32xi32>
    %272 = arith.cmpi sgt, %7, %271 : vector<2x32xi32>
    %273 = vector.extract_strided_slice %0 {offsets = [0, 5], sizes = [2, 1], strides = [1, 1]} : vector<2x8xi32> to vector<2x1xi32>
    %274 = vector.broadcast %273 : vector<2x1xi32> to vector<2x16xi32>
    %275 = arith.cmpi eq, %274, %13 : vector<2x16xi32>
    %276 = arith.extui %275 : vector<2x16xi1> to vector<2x16xi32>
    %277 = arith.sitofp %276 : vector<2x16xi32> to vector<2x16xf32>
    %278 = arith.truncf %277 : vector<2x16xf32> to vector<2x16xbf16>
    %cst_28 = arith.constant dense<0.000000e+00> : vector<2x128xf32>
    %279 = tpu.matmul %278, %8, %cst_28 {dimension_numbers = #tpu.dot_dimension_numbers<[1], [0], [0], [1], [0, 0, 1, 1], [], []>} : vector<2x16xbf16>, vector<16x128xbf16>, vector<2x128xf32> -> vector<2x128xf32>
    %280 = arith.addf %279, %250 : vector<2x128xf32>
    %281 = arith.negf %280 : vector<2x128xf32>
    %282 = math.exp %281 : vector<2x128xf32>
    %cst_29 = arith.constant 1.000000e+00 : f32
    %283 = vector.broadcast %cst_29 : f32 to vector<2x128xf32>
    %284 = arith.addf %283, %282 : vector<2x128xf32>
    %285 = arith.divf %283, %284 : vector<2x128xf32>
    %286 = math.tanh %280 : vector<2x128xf32>
    %287 = vector.extract_strided_slice %285 {offsets = [0, 0], sizes = [2, 32], strides = [1, 1]} : vector<2x128xf32> to vector<2x32xf32>
    %288 = vector.extract_strided_slice %285 {offsets = [0, 32], sizes = [2, 32], strides = [1, 1]} : vector<2x128xf32> to vector<2x32xf32>
    %289 = vector.extract_strided_slice %285 {offsets = [0, 96], sizes = [2, 32], strides = [1, 1]} : vector<2x128xf32> to vector<2x32xf32>
    %290 = vector.extract_strided_slice %286 {offsets = [0, 64], sizes = [2, 32], strides = [1, 1]} : vector<2x128xf32> to vector<2x32xf32>
    %291 = arith.mulf %288, %246 : vector<2x32xf32>
    %292 = arith.mulf %287, %290 : vector<2x32xf32>
    %293 = arith.addf %291, %292 : vector<2x32xf32>
    %294 = math.tanh %293 : vector<2x32xf32>
    %295 = arith.mulf %289, %294 : vector<2x32xf32>
    %296 = arith.select %272, %295, %245 : vector<2x32xi1>, vector<2x32xf32>
    %297 = arith.select %272, %293, %246 : vector<2x32xi1>, vector<2x32xf32>
    %298 = tpu.concatenate %296, %269 in 1 : vector<2x32xf32>, vector<2x32xf32> -> vector<2x64xf32>
    %299 = arith.truncf %298 : vector<2x64xf32> to vector<2x64xbf16>
    %cst_30 = arith.constant dense<0.000000e+00> : vector<2x256xf32>
    %300 = tpu.matmul %299, %9, %cst_30 {dimension_numbers = #tpu.dot_dimension_numbers<[1], [0], [0], [1], [0, 0, 1, 1], [], []>} : vector<2x64xbf16>, vector<64x256xbf16>, vector<2x256xf32> -> vector<2x256xf32>
    %301 = vector.extract_strided_slice %300 {offsets = [0, 0], sizes = [2, 128], strides = [1, 1]} : vector<2x256xf32> to vector<2x128xf32>
    %302 = vector.extract_strided_slice %300 {offsets = [0, 128], sizes = [2, 128], strides = [1, 1]} : vector<2x256xf32> to vector<2x128xf32>
    %303 = vector.broadcast %12 : vector<1x128xf32> to vector<2x128xf32>
    %304 = arith.addf %302, %303 : vector<2x128xf32>
    %305 = arith.negf %304 : vector<2x128xf32>
    %306 = math.exp %305 : vector<2x128xf32>
    %cst_31 = arith.constant 1.000000e+00 : f32
    %307 = vector.broadcast %cst_31 : f32 to vector<2x128xf32>
    %308 = arith.addf %307, %306 : vector<2x128xf32>
    %309 = arith.divf %307, %308 : vector<2x128xf32>
    %310 = math.tanh %304 : vector<2x128xf32>
    %311 = vector.extract_strided_slice %309 {offsets = [0, 0], sizes = [2, 32], strides = [1, 1]} : vector<2x128xf32> to vector<2x32xf32>
    %312 = vector.extract_strided_slice %309 {offsets = [0, 32], sizes = [2, 32], strides = [1, 1]} : vector<2x128xf32> to vector<2x32xf32>
    %313 = vector.extract_strided_slice %309 {offsets = [0, 96], sizes = [2, 32], strides = [1, 1]} : vector<2x128xf32> to vector<2x32xf32>
    %314 = vector.extract_strided_slice %310 {offsets = [0, 64], sizes = [2, 32], strides = [1, 1]} : vector<2x128xf32> to vector<2x32xf32>
    %315 = arith.mulf %312, %270 : vector<2x32xf32>
    %316 = arith.mulf %311, %314 : vector<2x32xf32>
    %317 = arith.addf %315, %316 : vector<2x32xf32>
    %318 = math.tanh %317 : vector<2x32xf32>
    %319 = arith.mulf %313, %318 : vector<2x32xf32>
    %320 = arith.select %272, %319, %269 : vector<2x32xi1>, vector<2x32xf32>
    %321 = arith.select %272, %317, %270 : vector<2x32xi1>, vector<2x32xf32>
    %c6_i32 = arith.constant 6 : i32
    %322 = vector.broadcast %c6_i32 : i32 to vector<2x32xi32>
    %323 = arith.cmpi sgt, %7, %322 : vector<2x32xi32>
    %324 = vector.extract_strided_slice %0 {offsets = [0, 6], sizes = [2, 1], strides = [1, 1]} : vector<2x8xi32> to vector<2x1xi32>
    %325 = vector.broadcast %324 : vector<2x1xi32> to vector<2x16xi32>
    %326 = arith.cmpi eq, %325, %13 : vector<2x16xi32>
    %327 = arith.extui %326 : vector<2x16xi1> to vector<2x16xi32>
    %328 = arith.sitofp %327 : vector<2x16xi32> to vector<2x16xf32>
    %329 = arith.truncf %328 : vector<2x16xf32> to vector<2x16xbf16>
    %cst_32 = arith.constant dense<0.000000e+00> : vector<2x128xf32>
    %330 = tpu.matmul %329, %8, %cst_32 {dimension_numbers = #tpu.dot_dimension_numbers<[1], [0], [0], [1], [0, 0, 1, 1], [], []>} : vector<2x16xbf16>, vector<16x128xbf16>, vector<2x128xf32> -> vector<2x128xf32>
    %331 = arith.addf %330, %301 : vector<2x128xf32>
    %332 = arith.negf %331 : vector<2x128xf32>
    %333 = math.exp %332 : vector<2x128xf32>
    %cst_33 = arith.constant 1.000000e+00 : f32
    %334 = vector.broadcast %cst_33 : f32 to vector<2x128xf32>
    %335 = arith.addf %334, %333 : vector<2x128xf32>
    %336 = arith.divf %334, %335 : vector<2x128xf32>
    %337 = math.tanh %331 : vector<2x128xf32>
    %338 = vector.extract_strided_slice %336 {offsets = [0, 0], sizes = [2, 32], strides = [1, 1]} : vector<2x128xf32> to vector<2x32xf32>
    %339 = vector.extract_strided_slice %336 {offsets = [0, 32], sizes = [2, 32], strides = [1, 1]} : vector<2x128xf32> to vector<2x32xf32>
    %340 = vector.extract_strided_slice %336 {offsets = [0, 96], sizes = [2, 32], strides = [1, 1]} : vector<2x128xf32> to vector<2x32xf32>
    %341 = vector.extract_strided_slice %337 {offsets = [0, 64], sizes = [2, 32], strides = [1, 1]} : vector<2x128xf32> to vector<2x32xf32>
    %342 = arith.mulf %339, %297 : vector<2x32xf32>
    %343 = arith.mulf %338, %341 : vector<2x32xf32>
    %344 = arith.addf %342, %343 : vector<2x32xf32>
    %345 = math.tanh %344 : vector<2x32xf32>
    %346 = arith.mulf %340, %345 : vector<2x32xf32>
    %347 = arith.select %323, %346, %296 : vector<2x32xi1>, vector<2x32xf32>
    %348 = arith.select %323, %344, %297 : vector<2x32xi1>, vector<2x32xf32>
    %349 = tpu.concatenate %347, %320 in 1 : vector<2x32xf32>, vector<2x32xf32> -> vector<2x64xf32>
    %350 = arith.truncf %349 : vector<2x64xf32> to vector<2x64xbf16>
    %cst_34 = arith.constant dense<0.000000e+00> : vector<2x256xf32>
    %351 = tpu.matmul %350, %9, %cst_34 {dimension_numbers = #tpu.dot_dimension_numbers<[1], [0], [0], [1], [0, 0, 1, 1], [], []>} : vector<2x64xbf16>, vector<64x256xbf16>, vector<2x256xf32> -> vector<2x256xf32>
    %352 = vector.extract_strided_slice %351 {offsets = [0, 0], sizes = [2, 128], strides = [1, 1]} : vector<2x256xf32> to vector<2x128xf32>
    %353 = vector.extract_strided_slice %351 {offsets = [0, 128], sizes = [2, 128], strides = [1, 1]} : vector<2x256xf32> to vector<2x128xf32>
    %354 = vector.broadcast %12 : vector<1x128xf32> to vector<2x128xf32>
    %355 = arith.addf %353, %354 : vector<2x128xf32>
    %356 = arith.negf %355 : vector<2x128xf32>
    %357 = math.exp %356 : vector<2x128xf32>
    %cst_35 = arith.constant 1.000000e+00 : f32
    %358 = vector.broadcast %cst_35 : f32 to vector<2x128xf32>
    %359 = arith.addf %358, %357 : vector<2x128xf32>
    %360 = arith.divf %358, %359 : vector<2x128xf32>
    %361 = math.tanh %355 : vector<2x128xf32>
    %362 = vector.extract_strided_slice %360 {offsets = [0, 0], sizes = [2, 32], strides = [1, 1]} : vector<2x128xf32> to vector<2x32xf32>
    %363 = vector.extract_strided_slice %360 {offsets = [0, 32], sizes = [2, 32], strides = [1, 1]} : vector<2x128xf32> to vector<2x32xf32>
    %364 = vector.extract_strided_slice %360 {offsets = [0, 96], sizes = [2, 32], strides = [1, 1]} : vector<2x128xf32> to vector<2x32xf32>
    %365 = vector.extract_strided_slice %361 {offsets = [0, 64], sizes = [2, 32], strides = [1, 1]} : vector<2x128xf32> to vector<2x32xf32>
    %366 = arith.mulf %363, %321 : vector<2x32xf32>
    %367 = arith.mulf %362, %365 : vector<2x32xf32>
    %368 = arith.addf %366, %367 : vector<2x32xf32>
    %369 = math.tanh %368 : vector<2x32xf32>
    %370 = arith.mulf %364, %369 : vector<2x32xf32>
    %371 = arith.select %323, %370, %320 : vector<2x32xi1>, vector<2x32xf32>
    %372 = arith.select %323, %368, %321 : vector<2x32xi1>, vector<2x32xf32>
    %c7_i32 = arith.constant 7 : i32
    %373 = vector.broadcast %c7_i32 : i32 to vector<2x32xi32>
    %374 = arith.cmpi sgt, %7, %373 : vector<2x32xi32>
    %375 = vector.extract_strided_slice %0 {offsets = [0, 7], sizes = [2, 1], strides = [1, 1]} : vector<2x8xi32> to vector<2x1xi32>
    %376 = vector.broadcast %375 : vector<2x1xi32> to vector<2x16xi32>
    %377 = arith.cmpi eq, %376, %13 : vector<2x16xi32>
    %378 = arith.extui %377 : vector<2x16xi1> to vector<2x16xi32>
    %379 = arith.sitofp %378 : vector<2x16xi32> to vector<2x16xf32>
    %380 = arith.truncf %379 : vector<2x16xf32> to vector<2x16xbf16>
    %cst_36 = arith.constant dense<0.000000e+00> : vector<2x128xf32>
    %381 = tpu.matmul %380, %8, %cst_36 {dimension_numbers = #tpu.dot_dimension_numbers<[1], [0], [0], [1], [0, 0, 1, 1], [], []>} : vector<2x16xbf16>, vector<16x128xbf16>, vector<2x128xf32> -> vector<2x128xf32>
    %382 = arith.addf %381, %352 : vector<2x128xf32>
    %383 = arith.negf %382 : vector<2x128xf32>
    %384 = math.exp %383 : vector<2x128xf32>
    %cst_37 = arith.constant 1.000000e+00 : f32
    %385 = vector.broadcast %cst_37 : f32 to vector<2x128xf32>
    %386 = arith.addf %385, %384 : vector<2x128xf32>
    %387 = arith.divf %385, %386 : vector<2x128xf32>
    %388 = math.tanh %382 : vector<2x128xf32>
    %389 = vector.extract_strided_slice %387 {offsets = [0, 0], sizes = [2, 32], strides = [1, 1]} : vector<2x128xf32> to vector<2x32xf32>
    %390 = vector.extract_strided_slice %387 {offsets = [0, 32], sizes = [2, 32], strides = [1, 1]} : vector<2x128xf32> to vector<2x32xf32>
    %391 = vector.extract_strided_slice %387 {offsets = [0, 96], sizes = [2, 32], strides = [1, 1]} : vector<2x128xf32> to vector<2x32xf32>
    %392 = vector.extract_strided_slice %388 {offsets = [0, 64], sizes = [2, 32], strides = [1, 1]} : vector<2x128xf32> to vector<2x32xf32>
    %393 = arith.mulf %390, %348 : vector<2x32xf32>
    %394 = arith.mulf %389, %392 : vector<2x32xf32>
    %395 = arith.addf %393, %394 : vector<2x32xf32>
    %396 = math.tanh %395 : vector<2x32xf32>
    %397 = arith.mulf %391, %396 : vector<2x32xf32>
    %398 = arith.select %374, %397, %347 : vector<2x32xi1>, vector<2x32xf32>
    %399 = tpu.concatenate %398, %371 in 1 : vector<2x32xf32>, vector<2x32xf32> -> vector<2x64xf32>
    %400 = arith.truncf %399 : vector<2x64xf32> to vector<2x64xbf16>
    %cst_38 = arith.constant dense<0.000000e+00> : vector<2x256xf32>
    %401 = tpu.matmul %400, %9, %cst_38 {dimension_numbers = #tpu.dot_dimension_numbers<[1], [0], [0], [1], [0, 0, 1, 1], [], []>} : vector<2x64xbf16>, vector<64x256xbf16>, vector<2x256xf32> -> vector<2x256xf32>
    %402 = vector.extract_strided_slice %401 {offsets = [0, 128], sizes = [2, 128], strides = [1, 1]} : vector<2x256xf32> to vector<2x128xf32>
    %403 = vector.broadcast %12 : vector<1x128xf32> to vector<2x128xf32>
    %404 = arith.addf %402, %403 : vector<2x128xf32>
    %405 = arith.negf %404 : vector<2x128xf32>
    %406 = math.exp %405 : vector<2x128xf32>
    %cst_39 = arith.constant 1.000000e+00 : f32
    %407 = vector.broadcast %cst_39 : f32 to vector<2x128xf32>
    %408 = arith.addf %407, %406 : vector<2x128xf32>
    %409 = arith.divf %407, %408 : vector<2x128xf32>
    %410 = math.tanh %404 : vector<2x128xf32>
    %411 = vector.extract_strided_slice %409 {offsets = [0, 0], sizes = [2, 32], strides = [1, 1]} : vector<2x128xf32> to vector<2x32xf32>
    %412 = vector.extract_strided_slice %409 {offsets = [0, 32], sizes = [2, 32], strides = [1, 1]} : vector<2x128xf32> to vector<2x32xf32>
    %413 = vector.extract_strided_slice %409 {offsets = [0, 96], sizes = [2, 32], strides = [1, 1]} : vector<2x128xf32> to vector<2x32xf32>
    %414 = vector.extract_strided_slice %410 {offsets = [0, 64], sizes = [2, 32], strides = [1, 1]} : vector<2x128xf32> to vector<2x32xf32>
    %415 = arith.mulf %412, %372 : vector<2x32xf32>
    %416 = arith.mulf %411, %414 : vector<2x32xf32>
    %417 = arith.addf %415, %416 : vector<2x32xf32>
    %418 = math.tanh %417 : vector<2x32xf32>
    %419 = arith.mulf %413, %418 : vector<2x32xf32>
    %420 = arith.select %374, %419, %371 : vector<2x32xi1>, vector<2x32xf32>
    %c80 = arith.constant 80 : index
    %c0_40 = arith.constant 0 : index
    %421 = vector.load %arg1[%c80, %c0_40] : memref<160x256xbf16, #tpu.memory_space<vmem>>, vector<32x128xbf16>
    %c112 = arith.constant 112 : index
    %c0_41 = arith.constant 0 : index
    %422 = vector.load %arg1[%c112, %c0_41] : memref<160x256xbf16, #tpu.memory_space<vmem>>, vector<32x128xbf16>
    %423 = vector.extract_strided_slice %11 {offsets = [1, 0], sizes = [1, 128], strides = [1, 1]} : vector<16x128xf32> to vector<1x128xf32>
    %424 = vector.extract_strided_slice %11 {offsets = [2, 0], sizes = [1, 128], strides = [1, 1]} : vector<16x128xf32> to vector<1x128xf32>
    %425 = arith.truncf %420 : vector<2x32xf32> to vector<2x32xbf16>
    %cst_42 = arith.constant dense<0.000000e+00> : vector<2x128xf32>
    %426 = tpu.matmul %425, %421, %cst_42 {dimension_numbers = #tpu.dot_dimension_numbers<[1], [0], [0], [1], [0, 0, 1, 1], [], []>} : vector<2x32xbf16>, vector<32x128xbf16>, vector<2x128xf32> -> vector<2x128xf32>
    %427 = vector.broadcast %423 : vector<1x128xf32> to vector<2x128xf32>
    %428 = arith.addf %426, %427 : vector<2x128xf32>
    %429 = math.tanh %428 : vector<2x128xf32>
    %430 = vector.extract_strided_slice %429 {offsets = [0, 0], sizes = [2, 32], strides = [1, 1]} : vector<2x128xf32> to vector<2x32xf32>
    %431 = arith.truncf %430 : vector<2x32xf32> to vector<2x32xbf16>
    %cst_43 = arith.constant dense<0.000000e+00> : vector<2x128xf32>
    %432 = tpu.matmul %431, %422, %cst_43 {dimension_numbers = #tpu.dot_dimension_numbers<[1], [0], [0], [1], [0, 0, 1, 1], [], []>} : vector<2x32xbf16>, vector<32x128xbf16>, vector<2x128xf32> -> vector<2x128xf32>
    %433 = vector.broadcast %424 : vector<1x128xf32> to vector<2x128xf32>
    %434 = arith.addf %432, %433 : vector<2x128xf32>
    %c0_44 = arith.constant 0 : index
    %c0_45 = arith.constant 0 : index
    %435 = vector.load %arg2[%c0_44, %c0_45] : memref<2x128xf32, #tpu.memory_space<vmem>>, vector<2x128xf32>
    tpu.vector_store %arg2[%c0_44, %c0_45], %434 {strides = array<i32>} : memref<2x128xf32, #tpu.memory_space<vmem>>, vector<2x128xf32>,
    return
  }
}

</mosaic_0001>

<llo_original>
// kernel: lstm_acceptor_forward.1
$region0: #{lstm_acceptor_forward.1}
  #allocation0 [shape = 'u32[]', space=smem, size = 0x4, offset = 0x4, fixed_abs, tag = 'smem constant byte address 0x4 - core index']
  #allocation1 [shape = 'u32[72,128]{1,0:T(1,128)}', space=vmem, size = 0x9000, scoped, tag = 'internal scratch']
  %s0 = inlined_call_operand.hbm [shape: s32[2,8], index: 0, kind: input, shape index: {}]
  %s1 = inlined_call_operand.hbm [shape: bf16[160,256], index: 1, kind: input, shape index: {}]
  %s2 = inlined_call_operand.hbm [shape: f32[2,128], index: 2, kind: output, shape index: {}]
  %s3 = sld [smem:[#allocation0]]
  $region26: #{lstm_acceptor_forward.1} parent=0
    _
  %s5 = ssub.s32 1, %s3
  %s6 = scalar_select 0, %s5, %s3
  $region1: #{lstm_acceptor_forward.1} parent=0
    #allocation2 [shape = 'u8[1024]{0}', space=vmem, size = 0x400, scoped, tag = 'input window, operand 0, single buffered']
    #allocation3 [shape = 's32[1]{0}', space=sflag, size = 0x4, scoped, tag = 'scoped memory for lstm_acceptor_forward.1']
    #allocation4 [shape = 's32[1]{0}', space=sflag, size = 0x4, scoped, tag = 'scoped memory for lstm_acceptor_forward.1']
    #allocation5 [shape = 'u8[81920]{0}', space=vmem, size = 0x14000, scoped, tag = 'input window, operand 1, single buffered']
    #allocation6 [shape = 's32[1]{0}', space=sflag, size = 0x4, scoped, tag = 'scoped memory for lstm_acceptor_forward.1']
    #allocation7 [shape = 'u8[1024]{0}', space=vmem, size = 0x400, scoped, tag = 'output window, operand 0, single buffered']
    %7 = vsyncpa [#allocation3], 0
    %8 = vsyncpa [#allocation6], 0
    %9 = vsyncpa [#allocation4], 0
    // Predicated region
    $region2: #{lstm_acceptor_forward.1} parent=1 // pred_check
      _
    $region3: #{lstm_acceptor_forward.1} parent=1 // pred_check_branch
      %11 = sbr.rel (0) target = $region5
    $region4: #{lstm_acceptor_forward.1} parent=1 // pred_region
      %13 = vsyncadd [#allocation3], 0
      %s15 = sshll.u32 %s0, 4
      %s16 = int_to_ptr.hbm [resolvable:$true] %s15
      %s17 = sshll.u32 [#allocation2], 4
      %s18 = int_to_ptr.vmem [resolvable:$true] %s17
      %20 = dma.hbm_to_vmem [thread:$0]  %s16, 32, %s18, [#allocation3]
    $region5: #{lstm_acceptor_forward.1} parent=1 // pred_fallthru
      _
    // Predicated region
    $region6: #{lstm_acceptor_forward.1} parent=1 // pred_check
      _
    $region7: #{lstm_acceptor_forward.1} parent=1 // pred_check_branch
      %22 = sbr.rel (0) target = $region9
    $region8: #{lstm_acceptor_forward.1} parent=1 // pred_region
      %24 = vsyncadd [#allocation6], 0
      %s25 = sshll.u32 %s1, 4
      %s26 = int_to_ptr.hbm [resolvable:$true] %s25
      %s27 = sshll.u32 [#allocation5], 4
      %s28 = int_to_ptr.vmem [resolvable:$true] %s27
      %33 = dma.hbm_to_vmem [thread:$0]  %s26, 2560, %s28, [#allocation6], 128, 128, 8
    $region9: #{lstm_acceptor_forward.1} parent=1 // pred_fallthru
      _
    // Predicated region
    $region10: #{lstm_acceptor_forward.1} parent=1 // pred_check
      _
    $region11: #{lstm_acceptor_forward.1} parent=1 // pred_check_branch
      %35 = sbr.rel (0) target = $region13
    $region12: #{lstm_acceptor_forward.1} parent=1 // pred_region
      %37 = dma.done [#allocation3], 32
    $region13: #{lstm_acceptor_forward.1} parent=1 // pred_fallthru
      _
    // Predicated region
    $region14: #{lstm_acceptor_forward.1} parent=1 // pred_check
      _
    $region15: #{lstm_acceptor_forward.1} parent=1 // pred_check_branch
      %39 = sbr.rel (0) target = $region17
    $region16: #{lstm_acceptor_forward.1} parent=1 // pred_region
      %41 = dma.done [#allocation6], 2560
    $region17: #{lstm_acceptor_forward.1} parent=1 // pred_fallthru
      _
    %v43 = vld [vmem:[#allocation2] sm:$0x3]
    %vm44 = vcmp.ne.s32.totalorder %v43, 0
    %v45 = vsel %vm44, 1, 0
    %vm46 = vcmask 58368
    %v47 = vsel %vm46, %v45, 0
    %v48 = vand.u32 %v47, 65535
    %v49 = vshrl.u32 %v47, 16
    %v50 = vcvt.s32.f32 %v48
    %v51 = vcvt.s32.f32 %v49
    %52 = vadd.xlane.f32.xlu0 %v50
    %v53 = vpop.xlane.xlu0 %52
    %54 = vadd.xlane.f32.xlu0 %v51
    %v55 = vpop.xlane.xlu0 %54
    %v56 = vcvt.f32.s32 %v53
    %v57 = vcvt.f32.s32 %v55
    %v58 = vshll.u32 %v57, 16
    %v59 = vadd.s32 %v58, %v56
    %v60 = vld [vmem:[#allocation5] sm:$0xf]
    %v61 = vld [vmem:[#allocation5 + $0x8] sm:$0xf]
    %v62 = vld [vmem:[#allocation5 + $0x10] sm:$0xff]
    %v63 = vld [vmem:[#allocation5 + $0x18] sm:$0xff]
    %v64 = vld [vmem:[#allocation5 + $0x20] sm:$0xff]
    %v65 = vld [vmem:[#allocation5 + $0x28] sm:$0xff]
    %v66 = vld [vmem:[#allocation5 + $0x30] sm:$0xff]
    %v67 = vld [vmem:[#allocation5 + $0x38] sm:$0xff]
    %v68 = vld [vmem:[#allocation5 + $0x40] sm:$0xff]
    %v69 = vld [vmem:[#allocation5 + $0x48] sm:$0xff]
    %v70 = vld [vmem:[#allocation5 + $0x90] sm:$0xf]
    %v71 = vunpack.c.l.bf16 %v70
    %v72 = vlaneseq
    %v73 = vand.u32 %v72, 127
    %vm74 = vcmp.gt.s32.totalorder %v59, 0
    %75 = vset.pattern.permute.xlu0 0
    %76 = vperm.xlu0 %75, %v43
    %v77 = vpop.permute.xlu0 %76
    %vm78 = vcmp.eq.s32.totalorder %v77, %v73
    %v79 = vsel %vm78, 1, 0
    %v80 = vcvt.s32.f32 %v79
    %v81 = vpack.c.bf16 %v80, %v80
    %v84 = vunpack.c.l.b16 %v60
    %v85 = vunpack.c.l.b16 %v61
    %v86 = vpack.c.b16 %v85, %v84
    %vm88 = vcmask 130048
    %v90 = vsel %vm88, %v81, 0
    %92 = vmatpush.bf16.msra.mxu0 0
    %93 = vmatpush.bf16.msra.mxu0 0
    %94 = vmatpush.bf16.msra.mxu0 0
    %95 = vmatpush.bf16.msra.mxu0 0
    %96 = vmatpush.bf16.msra.mxu0 0
    %97 = vmatpush.bf16.msra.mxu0 0
    %98 = vmatpush.bf16.msra.mxu0 0
    %99 = vmatpush.bf16.msra.mxu0 %v86
    %100 = vmatmul.bf16.gmra.mxu0 %v90
    %v101 = vpop.f32.mrf.mxu0
    %v102 = vadd.f32 0.0, %v101
    %v103 = vpop.f32.mrf.mxu0
    %104 = vdwg.mxu0
    %v105 = vxor.u32 %v102, 2147483648
    %v106 = vmul.f32 %v105, 1.442695
    %v107 = vpow.pop %v106
    %v108 = vadd.f32 %v107, 1.0
    %v109 = vrcp.pop %v108
    %v110 = vmul.f32 %v108, %v109
    %v111 = vsub.f32 1.0, %v110
    %v112 = vmul.f32 %v109, %v111
    %v113 = vadd.f32 %v109, %v112
    %vm114 = vweird.f32 %v108
    %vm115 = vweird.f32 %v109
    %vm116 = vmor %vm114, %vm115
    %v117 = vsel %vm116, %v109, %v113
    %v118 = vand.u32 2147483647, %v108
    %vm119 = vcmp.eq.f32.partialorder %v118, 8.507059e+37
    %v120 = vand.u32 %v108, 2147483648
    %v121 = vor.u32 1.1754944e-38, %v120
    %v122 = vsel %vm119, %v121, %v117
    %v123 = vmul.f32 1.0, %v122
    %v124 = vtanh.pop %v102
    %v125 = vmul.f32 %v123, 0.0
    %127 = vrot.lane.b32.xlu0 %v124, 64
    %v128 = vpop.permute.xlu0 %127
    %v130 = vmul.f32 %v123, %v128
    %132 = vrot.lane.b32.xlu0 %v130, 32
    %v133 = vpop.permute.xlu0 %132
    %v135 = vadd.f32 %v125, %v133
    %v136 = vtanh.pop %v135
    %138 = vrot.lane.b32.xlu0 %v136, 64
    %v139 = vpop.permute.xlu0 %138
    %v141 = vmul.f32 %v123, %v139
    %v142 = vsel %vm74, %v141, 0.0
    %v143 = vsel %vm74, %v135, 0.0
    %145 = vrot.lane.b32.xlu0 %v142, 32
    %v146 = vpop.permute.xlu0 %145
    %vm148 = vcmask 261120
    %v149 = vsel %vm148, %v146, 0.0
    %v150 = vpack.c.bf16 %v149, %v149
    %v159 = vunpack.c.l.b16 %v62
    %v160 = vunpack.c.h.b16 %v62
    %v161 = vunpack.c.l.b16 %v63
    %v162 = vunpack.c.h.b16 %v63
    %v163 = vunpack.c.l.b16 %v64
    %v164 = vunpack.c.h.b16 %v64
    %v165 = vunpack.c.l.b16 %v65
    %v166 = vunpack.c.h.b16 %v65
    %v167 = vunpack.c.l.b16 %v66
    %v168 = vunpack.c.h.b16 %v66
    %v169 = vunpack.c.l.b16 %v67
    %v170 = vunpack.c.h.b16 %v67
    %v171 = vunpack.c.l.b16 %v68
    %v172 = vunpack.c.h.b16 %v68
    %v173 = vunpack.c.l.b16 %v69
    %v174 = vunpack.c.h.b16 %v69
    %v175 = vpack.c.b16 %v161, %v159
    %v176 = vpack.c.b16 %v162, %v160
    %v177 = vpack.c.b16 %v165, %v163
    %v178 = vpack.c.b16 %v166, %v164
    %v179 = vpack.c.b16 %v169, %v167
    %v180 = vpack.c.b16 %v170, %v168
    %v181 = vpack.c.b16 %v173, %v171
    %v182 = vpack.c.b16 %v174, %v172
    %vm191 = vcmask 523264
    %v193 = vsel %vm191, %v150, 0
    %195 = vmatpush.bf16.msra.mxu0 0
    %196 = vmatpush.bf16.msra.mxu0 0
    %197 = vmatpush.bf16.msra.mxu0 0
    %198 = vmatpush.bf16.msra.mxu0 0
    %199 = vmatpush.bf16.msra.mxu0 %v181
    %200 = vmatpush.bf16.msra.mxu0 %v179
    %201 = vmatpush.bf16.msra.mxu0 %v177
    %202 = vmatpush.bf16.msra.mxu0 %v175
    %203 = vmatmul.bf16.gmra.mxu0 %v193
    %v204 = vpop.f32.mrf.mxu0
    %v205 = vadd.f32 0.0, %v204
    %v206 = vpop.f32.mrf.mxu0
    %207 = vdwg.mxu0
    %208 = vmatpush.bf16.msra.mxu0 0
    %209 = vmatpush.bf16.msra.mxu0 0
    %210 = vmatpush.bf16.msra.mxu0 0
    %211 = vmatpush.bf16.msra.mxu0 0
    %212 = vmatpush.bf16.msra.mxu0 %v182
    %213 = vmatpush.bf16.msra.mxu0 %v180
    %214 = vmatpush.bf16.msra.mxu0 %v178
    %215 = vmatpush.bf16.msra.mxu0 %v176
    %216 = vmatmul.bf16.gmra.mxu0 %v193
    %v217 = vpop.f32.mrf.mxu0
    %v218 = vadd.f32 0.0, %v217
    %v219 = vpop.f32.mrf.mxu0
    %220 = vdwg.mxu0
    %v221 = vperm.slane %v71, 0
    %v222 = vadd.f32 %v218, %v221
    %v223 = vxor.u32 %v222, 2147483648
    %v224 = vmul.f32 %v223, 1.442695
    %v225 = vpow.pop %v224
    %v226 = vadd.f32 %v225, 1.0
    %v227 = vrcp.pop %v226
    %v228 = vmul.f32 %v226, %v227
    %v229 = vsub.f32 1.0, %v228
    %v230 = vmul.f32 %v227, %v229
    %v231 = vadd.f32 %v227, %v230
    %vm232 = vweird.f32 %v226
    %vm233 = vweird.f32 %v227
    %vm234 = vmor %vm232, %vm233
    %v235 = vsel %vm234, %v227, %v231
    %v236 = vand.u32 2147483647, %v226
    %vm237 = vcmp.eq.f32.partialorder %v236, 8.507059e+37
    %v238 = vand.u32 %v226, 2147483648
    %v239 = vor.u32 1.1754944e-38, %v238
    %v240 = vsel %vm237, %v239, %v235
    %v241 = vmul.f32 1.0, %v240
    %v242 = vtanh.pop %v222
    %v243 = vmul.f32 %v241, 0.0
    %245 = vrot.lane.b32.xlu0 %v242, 64
    %v246 = vpop.permute.xlu0 %245
    %v248 = vmul.f32 %v241, %v246
    %250 = vrot.lane.b32.xlu0 %v248, 32
    %v251 = vpop.permute.xlu0 %250
    %v253 = vadd.f32 %v243, %v251
    %v254 = vtanh.pop %v253
    %256 = vrot.lane.b32.xlu0 %v254, 64
    %v257 = vpop.permute.xlu0 %256
    %v259 = vmul.f32 %v241, %v257
    %v260 = vsel %vm74, %v259, 0.0
    %v261 = vsel %vm74, %v253, 0.0
    %vm262 = vcmp.gt.s32.totalorder %v59, 1
    %263 = vset.pattern.permute.xlu0 1
    %264 = vperm.xlu0 %263, %v43
    %v265 = vpop.permute.xlu0 %264
    %vm266 = vcmp.eq.s32.totalorder %v265, %v73
    %v267 = vsel %vm266, 1, 0
    %v268 = vcvt.s32.f32 %v267
    %v269 = vpack.c.bf16 %v268, %v268
    %v271 = vsel %vm88, %v269, 0
    %273 = vmatpush.bf16.msra.mxu0 0
    %274 = vmatpush.bf16.msra.mxu0 0
    %275 = vmatpush.bf16.msra.mxu0 0
    %276 = vmatpush.bf16.msra.mxu0 0
    %277 = vmatpush.bf16.msra.mxu0 0
    %278 = vmatpush.bf16.msra.mxu0 0
    %279 = vmatpush.bf16.msra.mxu0 0
    %280 = vmatpush.bf16.msra.mxu0 %v86
    %281 = vmatmul.bf16.gmra.mxu0 %v271
    %v282 = vpop.f32.mrf.mxu0
    %v283 = vadd.f32 %v205, %v282
    %v284 = vpop.f32.mrf.mxu0
    %285 = vdwg.mxu0
    %v286 = vxor.u32 %v283, 2147483648
    %v287 = vmul.f32 %v286, 1.442695
    %v288 = vpow.pop %v287
    %v289 = vadd.f32 %v288, 1.0
    %v290 = vrcp.pop %v289
    %v291 = vmul.f32 %v289, %v290
    %v292 = vsub.f32 1.0, %v291
    %v293 = vmul.f32 %v290, %v292
    %v294 = vadd.f32 %v290, %v293
    %vm295 = vweird.f32 %v289
    %vm296 = vweird.f32 %v290
    %vm297 = vmor %vm295, %vm296
    %v298 = vsel %vm297, %v290, %v294
    %v299 = vand.u32 2147483647, %v289
    %vm300 = vcmp.eq.f32.partialorder %v299, 8.507059e+37
    %v301 = vand.u32 %v289, 2147483648
    %v302 = vor.u32 1.1754944e-38, %v301
    %v303 = vsel %vm300, %v302, %v298
    %v304 = vmul.f32 1.0, %v303
    %v305 = vtanh.pop %v283
    %v306 = vmul.f32 %v304, %v143
    %308 = vrot.lane.b32.xlu0 %v305, 64
    %v309 = vpop.permute.xlu0 %308
    %v311 = vmul.f32 %v304, %v309
    %313 = vrot.lane.b32.xlu0 %v311, 32
    %v314 = vpop.permute.xlu0 %313
    %v316 = vadd.f32 %v306, %v314
    %v317 = vtanh.pop %v316
    %319 = vrot.lane.b32.xlu0 %v317, 64
    %v320 = vpop.permute.xlu0 %319
    %v322 = vmul.f32 %v304, %v320
    %v323 = vsel %vm262, %v322, %v142
    %v324 = vsel %vm262, %v316, %v143
    %326 = vrot.lane.b32.xlu0 %v323, 32
    %v327 = vpop.permute.xlu0 %326
    %330 = vrot.lane.b32.xlu0 %v260, 64
    %v331 = vpop.permute.xlu0 %330
    %v333 = vsel %vm148, %v327, %v331
    %v334 = vpack.c.bf16 %v333, %v333
    %v336 = vsel %vm191, %v334, 0
    %338 = vmatpush.bf16.msra.mxu0 0
    %339 = vmatpush.bf16.msra.mxu0 0
    %340 = vmatpush.bf16.msra.mxu0 0
    %341 = vmatpush.bf16.msra.mxu0 0
    %342 = vmatpush.bf16.msra.mxu0 %v181
    %343 = vmatpush.bf16.msra.mxu0 %v179
    %344 = vmatpush.bf16.msra.mxu0 %v177
    %345 = vmatpush.bf16.msra.mxu0 %v175
    %346 = vmatmul.bf16.gmra.mxu0 %v336
    %v347 = vpop.f32.mrf.mxu0
    %v348 = vadd.f32 0.0, %v347
    %v349 = vpop.f32.mrf.mxu0
    %350 = vdwg.mxu0
    %351 = vmatpush.bf16.msra.mxu0 0
    %352 = vmatpush.bf16.msra.mxu0 0
    %353 = vmatpush.bf16.msra.mxu0 0
    %354 = vmatpush.bf16.msra.mxu0 0
    %355 = vmatpush.bf16.msra.mxu0 %v182
    %356 = vmatpush.bf16.msra.mxu0 %v180
    %357 = vmatpush.bf16.msra.mxu0 %v178
    %358 = vmatpush.bf16.msra.mxu0 %v176
    %359 = vmatmul.bf16.gmra.mxu0 %v336
    %v360 = vpop.f32.mrf.mxu0
    %v361 = vadd.f32 0.0, %v360
    %v362 = vpop.f32.mrf.mxu0
    %363 = vdwg.mxu0
    %v364 = vadd.f32 %v361, %v221
    %v365 = vxor.u32 %v364, 2147483648
    %v366 = vmul.f32 %v365, 1.442695
    %v367 = vpow.pop %v366
    %v368 = vadd.f32 %v367, 1.0
    %v369 = vrcp.pop %v368
    %v370 = vmul.f32 %v368, %v369
    %v371 = vsub.f32 1.0, %v370
    %v372 = vmul.f32 %v369, %v371
    %v373 = vadd.f32 %v369, %v372
    %vm374 = vweird.f32 %v368
    %vm375 = vweird.f32 %v369
    %vm376 = vmor %vm374, %vm375
    %v377 = vsel %vm376, %v369, %v373
    %v378 = vand.u32 2147483647, %v368
    %vm379 = vcmp.eq.f32.partialorder %v378, 8.507059e+37
    %v380 = vand.u32 %v368, 2147483648
    %v381 = vor.u32 1.1754944e-38, %v380
    %v382 = vsel %vm379, %v381, %v377
    %v383 = vmul.f32 1.0, %v382
    %v384 = vtanh.pop %v364
    %v385 = vmul.f32 %v383, %v261
    %387 = vrot.lane.b32.xlu0 %v384, 64
    %v388 = vpop.permute.xlu0 %387
    %v390 = vmul.f32 %v383, %v388
    %392 = vrot.lane.b32.xlu0 %v390, 32
    %v393 = vpop.permute.xlu0 %392
    %v395 = vadd.f32 %v385, %v393
    %v396 = vtanh.pop %v395
    %398 = vrot.lane.b32.xlu0 %v396, 64
    %v399 = vpop.permute.xlu0 %398
    %v401 = vmul.f32 %v383, %v399
    %v402 = vsel %vm262, %v401, %v260
    %v403 = vsel %vm262, %v395, %v261
    %vm404 = vcmp.gt.s32.totalorder %v59, 2
    %405 = vset.pattern.permute.xlu0 2
    %406 = vperm.xlu0 %405, %v43
    %v407 = vpop.permute.xlu0 %406
    %vm408 = vcmp.eq.s32.totalorder %v407, %v73
    %v409 = vsel %vm408, 1, 0
    %v410 = vcvt.s32.f32 %v409
    %v411 = vpack.c.bf16 %v410, %v410
    %v413 = vsel %vm88, %v411, 0
    %415 = vmatpush.bf16.msra.mxu0 0
    %416 = vmatpush.bf16.msra.mxu0 0
    %417 = vmatpush.bf16.msra.mxu0 0
    %418 = vmatpush.bf16.msra.mxu0 0
    %419 = vmatpush.bf16.msra.mxu0 0
    %420 = vmatpush.bf16.msra.mxu0 0
    %421 = vmatpush.bf16.msra.mxu0 0
    %422 = vmatpush.bf16.msra.mxu0 %v86
    %423 = vmatmul.bf16.gmra.mxu0 %v413
    %v424 = vpop.f32.mrf.mxu0
    %v425 = vadd.f32 %v348, %v424
    %v426 = vpop.f32.mrf.mxu0
    %427 = vdwg.mxu0
    %v428 = vxor.u32 %v425, 2147483648
    %v429 = vmul.f32 %v428, 1.442695
    %v430 = vpow.pop %v429
    %v431 = vadd.f32 %v430, 1.0
    %v432 = vrcp.pop %v431
    %v433 = vmul.f32 %v431, %v432
    %v434 = vsub.f32 1.0, %v433
    %v435 = vmul.f32 %v432, %v434
    %v436 = vadd.f32 %v432, %v435
    %vm437 = vweird.f32 %v431
    %vm438 = vweird.f32 %v432
    %vm439 = vmor %vm437, %vm438
    %v440 = vsel %vm439, %v432, %v436
    %v441 = vand.u32 2147483647, %v431
    %vm442 = vcmp.eq.f32.partialorder %v441, 8.507059e+37
    %v443 = vand.u32 %v431, 2147483648
    %v444 = vor.u32 1.1754944e-38, %v443
    %v445 = vsel %vm442, %v444, %v440
    %v446 = vmul.f32 1.0, %v445
    %v447 = vtanh.pop %v425
    %v448 = vmul.f32 %v446, %v324
    %450 = vrot.lane.b32.xlu0 %v447, 64
    %v451 = vpop.permute.xlu0 %450
    %v453 = vmul.f32 %v446, %v451
    %455 = vrot.lane.b32.xlu0 %v453, 32
    %v456 = vpop.permute.xlu0 %455
    %v458 = vadd.f32 %v448, %v456
    %v459 = vtanh.pop %v458
    %461 = vrot.lane.b32.xlu0 %v459, 64
    %v462 = vpop.permute.xlu0 %461
    %v464 = vmul.f32 %v446, %v462
    %v465 = vsel %vm404, %v464, %v323
    %v466 = vsel %vm404, %v458, %v324
    %468 = vrot.lane.b32.xlu0 %v465, 32
    %v469 = vpop.permute.xlu0 %468
    %472 = vrot.lane.b32.xlu0 %v402, 64
    %v473 = vpop.permute.xlu0 %472
    %v475 = vsel %vm148, %v469, %v473
    %v476 = vpack.c.bf16 %v475, %v475
    %v478 = vsel %vm191, %v476, 0
    %480 = vmatpush.bf16.msra.mxu0 0
    %481 = vmatpush.bf16.msra.mxu0 0
    %482 = vmatpush.bf16.msra.mxu0 0
    %483 = vmatpush.bf16.msra.mxu0 0
    %484 = vmatpush.bf16.msra.mxu0 %v181
    %485 = vmatpush.bf16.msra.mxu0 %v179
    %486 = vmatpush.bf16.msra.mxu0 %v177
    %487 = vmatpush.bf16.msra.mxu0 %v175
    %488 = vmatmul.bf16.gmra.mxu0 %v478
    %v489 = vpop.f32.mrf.mxu0
    %v490 = vadd.f32 0.0, %v489
    %v491 = vpop.f32.mrf.mxu0
    %492 = vdwg.mxu0
    %493 = vmatpush.bf16.msra.mxu0 0
    %494 = vmatpush.bf16.msra.mxu0 0
    %495 = vmatpush.bf16.msra.mxu0 0
    %496 = vmatpush.bf16.msra.mxu0 0
    %497 = vmatpush.bf16.msra.mxu0 %v182
    %498 = vmatpush.bf16.msra.mxu0 %v180
    %499 = vmatpush.bf16.msra.mxu0 %v178
    %500 = vmatpush.bf16.msra.mxu0 %v176
    %501 = vmatmul.bf16.gmra.mxu0 %v478
    %v502 = vpop.f32.mrf.mxu0
    %v503 = vadd.f32 0.0, %v502
    %v504 = vpop.f32.mrf.mxu0
    %505 = vdwg.mxu0
    %v506 = vadd.f32 %v503, %v221
    %v507 = vxor.u32 %v506, 2147483648
    %v508 = vmul.f32 %v507, 1.442695
    %v509 = vpow.pop %v508
    %v510 = vadd.f32 %v509, 1.0
    %v511 = vrcp.pop %v510
    %v512 = vmul.f32 %v510, %v511
    %v513 = vsub.f32 1.0, %v512
    %v514 = vmul.f32 %v511, %v513
    %v515 = vadd.f32 %v511, %v514
    %vm516 = vweird.f32 %v510
    %vm517 = vweird.f32 %v511
    %vm518 = vmor %vm516, %vm517
    %v519 = vsel %vm518, %v511, %v515
    %v520 = vand.u32 2147483647, %v510
    %vm521 = vcmp.eq.f32.partialorder %v520, 8.507059e+37
    %v522 = vand.u32 %v510, 2147483648
    %v523 = vor.u32 1.1754944e-38, %v522
    %v524 = vsel %vm521, %v523, %v519
    %v525 = vmul.f32 1.0, %v524
    %v526 = vtanh.pop %v506
    %v527 = vmul.f32 %v525, %v403
    %529 = vrot.lane.b32.xlu0 %v526, 64
    %v530 = vpop.permute.xlu0 %529
    %v532 = vmul.f32 %v525, %v530
    %534 = vrot.lane.b32.xlu0 %v532, 32
    %v535 = vpop.permute.xlu0 %534
    %v537 = vadd.f32 %v527, %v535
    %v538 = vtanh.pop %v537
    %540 = vrot.lane.b32.xlu0 %v538, 64
    %v541 = vpop.permute.xlu0 %540
    %v543 = vmul.f32 %v525, %v541
    %v544 = vsel %vm404, %v543, %v402
    %v545 = vsel %vm404, %v537, %v403
    %vm546 = vcmp.gt.s32.totalorder %v59, 3
    %547 = vset.pattern.permute.xlu0 3
    %548 = vperm.xlu0 %547, %v43
    %v549 = vpop.permute.xlu0 %548
    %vm550 = vcmp.eq.s32.totalorder %v549, %v73
    %v551 = vsel %vm550, 1, 0
    %v552 = vcvt.s32.f32 %v551
    %v553 = vpack.c.bf16 %v552, %v552
    %v555 = vsel %vm88, %v553, 0
    %557 = vmatpush.bf16.msra.mxu0 0
    %558 = vmatpush.bf16.msra.mxu0 0
    %559 = vmatpush.bf16.msra.mxu0 0
    %560 = vmatpush.bf16.msra.mxu0 0
    %561 = vmatpush.bf16.msra.mxu0 0
    %562 = vmatpush.bf16.msra.mxu0 0
    %563 = vmatpush.bf16.msra.mxu0 0
    %564 = vmatpush.bf16.msra.mxu0 %v86
    %565 = vmatmul.bf16.gmra.mxu0 %v555
    %v566 = vpop.f32.mrf.mxu0
    %v567 = vadd.f32 %v490, %v566
    %v568 = vpop.f32.mrf.mxu0
    %569 = vdwg.mxu0
    %v570 = vxor.u32 %v567, 2147483648
    %v571 = vmul.f32 %v570, 1.442695
    %v572 = vpow.pop %v571
    %v573 = vadd.f32 %v572, 1.0
    %v574 = vrcp.pop %v573
    %v575 = vmul.f32 %v573, %v574
    %v576 = vsub.f32 1.0, %v575
    %v577 = vmul.f32 %v574, %v576
    %v578 = vadd.f32 %v574, %v577
    %vm579 = vweird.f32 %v573
    %vm580 = vweird.f32 %v574
    %vm581 = vmor %vm579, %vm580
    %v582 = vsel %vm581, %v574, %v578
    %v583 = vand.u32 2147483647, %v573
    %vm584 = vcmp.eq.f32.partialorder %v583, 8.507059e+37
    %v585 = vand.u32 %v573, 2147483648
    %v586 = vor.u32 1.1754944e-38, %v585
    %v587 = vsel %vm584, %v586, %v582
    %v588 = vmul.f32 1.0, %v587
    %v589 = vtanh.pop %v567
    %v590 = vmul.f32 %v588, %v466
    %592 = vrot.lane.b32.xlu0 %v589, 64
    %v593 = vpop.permute.xlu0 %592
    %v595 = vmul.f32 %v588, %v593
    %597 = vrot.lane.b32.xlu0 %v595, 32
    %v598 = vpop.permute.xlu0 %597
    %v600 = vadd.f32 %v590, %v598
    %v601 = vtanh.pop %v600
    %603 = vrot.lane.b32.xlu0 %v601, 64
    %v604 = vpop.permute.xlu0 %603
    %v606 = vmul.f32 %v588, %v604
    %v607 = vsel %vm546, %v606, %v465
    %v608 = vsel %vm546, %v600, %v466
    %610 = vrot.lane.b32.xlu0 %v607, 32
    %v611 = vpop.permute.xlu0 %610
    %614 = vrot.lane.b32.xlu0 %v544, 64
    %v615 = vpop.permute.xlu0 %614
    %v617 = vsel %vm148, %v611, %v615
    %v618 = vpack.c.bf16 %v617, %v617
    %v620 = vsel %vm191, %v618, 0
    %622 = vmatpush.bf16.msra.mxu0 0
    %623 = vmatpush.bf16.msra.mxu0 0
    %624 = vmatpush.bf16.msra.mxu0 0
    %625 = vmatpush.bf16.msra.mxu0 0
    %626 = vmatpush.bf16.msra.mxu0 %v181
    %627 = vmatpush.bf16.msra.mxu0 %v179
    %628 = vmatpush.bf16.msra.mxu0 %v177
    %629 = vmatpush.bf16.msra.mxu0 %v175
    %630 = vmatmul.bf16.gmra.mxu0 %v620
    %v631 = vpop.f32.mrf.mxu0
    %v632 = vadd.f32 0.0, %v631
    %v633 = vpop.f32.mrf.mxu0
    %634 = vdwg.mxu0
    %635 = vmatpush.bf16.msra.mxu0 0
    %636 = vmatpush.bf16.msra.mxu0 0
    %637 = vmatpush.bf16.msra.mxu0 0
    %638 = vmatpush.bf16.msra.mxu0 0
    %639 = vmatpush.bf16.msra.mxu0 %v182
    %640 = vmatpush.bf16.msra.mxu0 %v180
    %641 = vmatpush.bf16.msra.mxu0 %v178
    %642 = vmatpush.bf16.msra.mxu0 %v176
    %643 = vmatmul.bf16.gmra.mxu0 %v620
    %v644 = vpop.f32.mrf.mxu0
    %v645 = vadd.f32 0.0, %v644
    %v646 = vpop.f32.mrf.mxu0
    %647 = vdwg.mxu0
    %v648 = vadd.f32 %v645, %v221
    %v649 = vxor.u32 %v648, 2147483648
    %v650 = vmul.f32 %v649, 1.442695
    %v651 = vpow.pop %v650
    %v652 = vadd.f32 %v651, 1.0
    %v653 = vrcp.pop %v652
    %v654 = vmul.f32 %v652, %v653
    %v655 = vsub.f32 1.0, %v654
    %v656 = vmul.f32 %v653, %v655
    %v657 = vadd.f32 %v653, %v656
    %vm658 = vweird.f32 %v652
    %vm659 = vweird.f32 %v653
    %vm660 = vmor %vm658, %vm659
    %v661 = vsel %vm660, %v653, %v657
    %v662 = vand.u32 2147483647, %v652
    %vm663 = vcmp.eq.f32.partialorder %v662, 8.507059e+37
    %v664 = vand.u32 %v652, 2147483648
    %v665 = vor.u32 1.1754944e-38, %v664
    %v666 = vsel %vm663, %v665, %v661
    %v667 = vmul.f32 1.0, %v666
    %v668 = vtanh.pop %v648
    %v669 = vmul.f32 %v667, %v545
    %671 = vrot.lane.b32.xlu0 %v668, 64
    %v672 = vpop.permute.xlu0 %671
    %v674 = vmul.f32 %v667, %v672
    %676 = vrot.lane.b32.xlu0 %v674, 32
    %v677 = vpop.permute.xlu0 %676
    %v679 = vadd.f32 %v669, %v677
    %v680 = vtanh.pop %v679
    %682 = vrot.lane.b32.xlu0 %v680, 64
    %v683 = vpop.permute.xlu0 %682
    %v685 = vmul.f32 %v667, %v683
    %v686 = vsel %vm546, %v685, %v544
    %v687 = vsel %vm546, %v679, %v545
    %vm688 = vcmp.gt.s32.totalorder %v59, 4
    %689 = vset.pattern.permute.xlu0 4
    %690 = vperm.xlu0 %689, %v43
    %v691 = vpop.permute.xlu0 %690
    %vm692 = vcmp.eq.s32.totalorder %v691, %v73
    %v693 = vsel %vm692, 1, 0
    %v694 = vcvt.s32.f32 %v693
    %v695 = vpack.c.bf16 %v694, %v694
    %v697 = vsel %vm88, %v695, 0
    %699 = vmatpush.bf16.msra.mxu0 0
    %700 = vmatpush.bf16.msra.mxu0 0
    %701 = vmatpush.bf16.msra.mxu0 0
    %702 = vmatpush.bf16.msra.mxu0 0
    %703 = vmatpush.bf16.msra.mxu0 0
    %704 = vmatpush.bf16.msra.mxu0 0
    %705 = vmatpush.bf16.msra.mxu0 0
    %706 = vmatpush.bf16.msra.mxu0 %v86
    %707 = vmatmul.bf16.gmra.mxu0 %v697
    %v708 = vpop.f32.mrf.mxu0
    %v709 = vadd.f32 %v632, %v708
    %v710 = vpop.f32.mrf.mxu0
    %711 = vdwg.mxu0
    %v712 = vxor.u32 %v709, 2147483648
    %v713 = vmul.f32 %v712, 1.442695
    %v714 = vpow.pop %v713
    %v715 = vadd.f32 %v714, 1.0
    %v716 = vrcp.pop %v715
    %v717 = vmul.f32 %v715, %v716
    %v718 = vsub.f32 1.0, %v717
    %v719 = vmul.f32 %v716, %v718
    %v720 = vadd.f32 %v716, %v719
    %vm721 = vweird.f32 %v715
    %vm722 = vweird.f32 %v716
    %vm723 = vmor %vm721, %vm722
    %v724 = vsel %vm723, %v716, %v720
    %v725 = vand.u32 2147483647, %v715
    %vm726 = vcmp.eq.f32.partialorder %v725, 8.507059e+37
    %v727 = vand.u32 %v715, 2147483648
    %v728 = vor.u32 1.1754944e-38, %v727
    %v729 = vsel %vm726, %v728, %v724
    %v730 = vmul.f32 1.0, %v729
    %v731 = vtanh.pop %v709
    %v732 = vmul.f32 %v730, %v608
    %734 = vrot.lane.b32.xlu0 %v731, 64
    %v735 = vpop.permute.xlu0 %734
    %v737 = vmul.f32 %v730, %v735
    %739 = vrot.lane.b32.xlu0 %v737, 32
    %v740 = vpop.permute.xlu0 %739
    %v742 = vadd.f32 %v732, %v740
    %v743 = vtanh.pop %v742
    %745 = vrot.lane.b32.xlu0 %v743, 64
    %v746 = vpop.permute.xlu0 %745
    %v748 = vmul.f32 %v730, %v746
    %v749 = vsel %vm688, %v748, %v607
    %v750 = vsel %vm688, %v742, %v608
    %752 = vrot.lane.b32.xlu0 %v749, 32
    %v753 = vpop.permute.xlu0 %752
    %756 = vrot.lane.b32.xlu0 %v686, 64
    %v757 = vpop.permute.xlu0 %756
    %v759 = vsel %vm148, %v753, %v757
    %v760 = vpack.c.bf16 %v759, %v759
    %v762 = vsel %vm191, %v760, 0
    %764 = vmatpush.bf16.msra.mxu0 0
    %765 = vmatpush.bf16.msra.mxu0 0
    %766 = vmatpush.bf16.msra.mxu0 0
    %767 = vmatpush.bf16.msra.mxu0 0
    %768 = vmatpush.bf16.msra.mxu0 %v181
    %769 = vmatpush.bf16.msra.mxu0 %v179
    %770 = vmatpush.bf16.msra.mxu0 %v177
    %771 = vmatpush.bf16.msra.mxu0 %v175
    %772 = vmatmul.bf16.gmra.mxu0 %v762
    %v773 = vpop.f32.mrf.mxu0
    %v774 = vadd.f32 0.0, %v773
    %v775 = vpop.f32.mrf.mxu0
    %776 = vdwg.mxu0
    %777 = vmatpush.bf16.msra.mxu0 0
    %778 = vmatpush.bf16.msra.mxu0 0
    %779 = vmatpush.bf16.msra.mxu0 0
    %780 = vmatpush.bf16.msra.mxu0 0
    %781 = vmatpush.bf16.msra.mxu0 %v182
    %782 = vmatpush.bf16.msra.mxu0 %v180
    %783 = vmatpush.bf16.msra.mxu0 %v178
    %784 = vmatpush.bf16.msra.mxu0 %v176
    %785 = vmatmul.bf16.gmra.mxu0 %v762
    %v786 = vpop.f32.mrf.mxu0
    %v787 = vadd.f32 0.0, %v786
    %v788 = vpop.f32.mrf.mxu0
    %789 = vdwg.mxu0
    %v790 = vadd.f32 %v787, %v221
    %v791 = vxor.u32 %v790, 2147483648
    %v792 = vmul.f32 %v791, 1.442695
    %v793 = vpow.pop %v792
    %v794 = vadd.f32 %v793, 1.0
    %v795 = vrcp.pop %v794
    %v796 = vmul.f32 %v794, %v795
    %v797 = vsub.f32 1.0, %v796
    %v798 = vmul.f32 %v795, %v797
    %v799 = vadd.f32 %v795, %v798
    %vm800 = vweird.f32 %v794
    %vm801 = vweird.f32 %v795
    %vm802 = vmor %vm800, %vm801
    %v803 = vsel %vm802, %v795, %v799
    %v804 = vand.u32 2147483647, %v794
    %vm805 = vcmp.eq.f32.partialorder %v804, 8.507059e+37
    %v806 = vand.u32 %v794, 2147483648
    %v807 = vor.u32 1.1754944e-38, %v806
    %v808 = vsel %vm805, %v807, %v803
    %v809 = vmul.f32 1.0, %v808
    %v810 = vtanh.pop %v790
    %v811 = vmul.f32 %v809, %v687
    %813 = vrot.lane.b32.xlu0 %v810, 64
    %v814 = vpop.permute.xlu0 %813
    %v816 = vmul.f32 %v809, %v814
    %818 = vrot.lane.b32.xlu0 %v816, 32
    %v819 = vpop.permute.xlu0 %818
    %v821 = vadd.f32 %v811, %v819
    %v822 = vtanh.pop %v821
    %824 = vrot.lane.b32.xlu0 %v822, 64
    %v825 = vpop.permute.xlu0 %824
    %v827 = vmul.f32 %v809, %v825
    %v828 = vsel %vm688, %v827, %v686
    %v829 = vsel %vm688, %v821, %v687
    %vm830 = vcmp.gt.s32.totalorder %v59, 5
    %831 = vset.pattern.permute.xlu0 5
    %832 = vperm.xlu0 %831, %v43
    %v833 = vpop.permute.xlu0 %832
    %vm834 = vcmp.eq.s32.totalorder %v833, %v73
    %v835 = vsel %vm834, 1, 0
    %v836 = vcvt.s32.f32 %v835
    %v837 = vpack.c.bf16 %v836, %v836
    %v839 = vsel %vm88, %v837, 0
    %841 = vmatpush.bf16.msra.mxu0 0
    %842 = vmatpush.bf16.msra.mxu0 0
    %843 = vmatpush.bf16.msra.mxu0 0
    %844 = vmatpush.bf16.msra.mxu0 0
    %845 = vmatpush.bf16.msra.mxu0 0
    %846 = vmatpush.bf16.msra.mxu0 0
    %847 = vmatpush.bf16.msra.mxu0 0
    %848 = vmatpush.bf16.msra.mxu0 %v86
    %849 = vmatmul.bf16.gmra.mxu0 %v839
    %v850 = vpop.f32.mrf.mxu0
    %v851 = vadd.f32 %v774, %v850
    %v852 = vpop.f32.mrf.mxu0
    %853 = vdwg.mxu0
    %v854 = vxor.u32 %v851, 2147483648
    %v855 = vmul.f32 %v854, 1.442695
    %v856 = vpow.pop %v855
    %v857 = vadd.f32 %v856, 1.0
    %v858 = vrcp.pop %v857
    %v859 = vmul.f32 %v857, %v858
    %v860 = vsub.f32 1.0, %v859
    %v861 = vmul.f32 %v858, %v860
    %v862 = vadd.f32 %v858, %v861
    %vm863 = vweird.f32 %v857
    %vm864 = vweird.f32 %v858
    %vm865 = vmor %vm863, %vm864
    %v866 = vsel %vm865, %v858, %v862
    %v867 = vand.u32 2147483647, %v857
    %vm868 = vcmp.eq.f32.partialorder %v867, 8.507059e+37
    %v869 = vand.u32 %v857, 2147483648
    %v870 = vor.u32 1.1754944e-38, %v869
    %v871 = vsel %vm868, %v870, %v866
    %v872 = vmul.f32 1.0, %v871
    %v873 = vtanh.pop %v851
    %v874 = vmul.f32 %v872, %v750
    %876 = vrot.lane.b32.xlu0 %v873, 64
    %v877 = vpop.permute.xlu0 %876
    %v879 = vmul.f32 %v872, %v877
    %881 = vrot.lane.b32.xlu0 %v879, 32
    %v882 = vpop.permute.xlu0 %881
    %v884 = vadd.f32 %v874, %v882
    %v885 = vtanh.pop %v884
    %887 = vrot.lane.b32.xlu0 %v885, 64
    %v888 = vpop.permute.xlu0 %887
    %v890 = vmul.f32 %v872, %v888
    %v891 = vsel %vm830, %v890, %v749
    %v892 = vsel %vm830, %v884, %v750
    %894 = vrot.lane.b32.xlu0 %v891, 32
    %v895 = vpop.permute.xlu0 %894
    %898 = vrot.lane.b32.xlu0 %v828, 64
    %v899 = vpop.permute.xlu0 %898
    %v901 = vsel %vm148, %v895, %v899
    %v902 = vpack.c.bf16 %v901, %v901
    %v904 = vsel %vm191, %v902, 0
    %906 = vmatpush.bf16.msra.mxu0 0
    %907 = vmatpush.bf16.msra.mxu0 0
    %908 = vmatpush.bf16.msra.mxu0 0
    %909 = vmatpush.bf16.msra.mxu0 0
    %910 = vmatpush.bf16.msra.mxu0 %v181
    %911 = vmatpush.bf16.msra.mxu0 %v179
    %912 = vmatpush.bf16.msra.mxu0 %v177
    %913 = vmatpush.bf16.msra.mxu0 %v175
    %914 = vmatmul.bf16.gmra.mxu0 %v904
    %v915 = vpop.f32.mrf.mxu0
    %v916 = vadd.f32 0.0, %v915
    %v917 = vpop.f32.mrf.mxu0
    %918 = vdwg.mxu0
    %919 = vmatpush.bf16.msra.mxu0 0
    %920 = vmatpush.bf16.msra.mxu0 0
    %921 = vmatpush.bf16.msra.mxu0 0
    %922 = vmatpush.bf16.msra.mxu0 0
    %923 = vmatpush.bf16.msra.mxu0 %v182
    %924 = vmatpush.bf16.msra.mxu0 %v180
    %925 = vmatpush.bf16.msra.mxu0 %v178
    %926 = vmatpush.bf16.msra.mxu0 %v176
    %927 = vmatmul.bf16.gmra.mxu0 %v904
    %v928 = vpop.f32.mrf.mxu0
    %v929 = vadd.f32 0.0, %v928
    %v930 = vpop.f32.mrf.mxu0
    %931 = vdwg.mxu0
    %v932 = vadd.f32 %v929, %v221
    %v933 = vxor.u32 %v932, 2147483648
    %v934 = vmul.f32 %v933, 1.442695
    %v935 = vpow.pop %v934
    %v936 = vadd.f32 %v935, 1.0
    %v937 = vrcp.pop %v936
    %v938 = vmul.f32 %v936, %v937
    %v939 = vsub.f32 1.0, %v938
    %v940 = vmul.f32 %v937, %v939
    %v941 = vadd.f32 %v937, %v940
    %vm942 = vweird.f32 %v936
    %vm943 = vweird.f32 %v937
    %vm944 = vmor %vm942, %vm943
    %v945 = vsel %vm944, %v937, %v941
    %v946 = vand.u32 2147483647, %v936
    %vm947 = vcmp.eq.f32.partialorder %v946, 8.507059e+37
    %v948 = vand.u32 %v936, 2147483648
    %v949 = vor.u32 1.1754944e-38, %v948
    %v950 = vsel %vm947, %v949, %v945
    %v951 = vmul.f32 1.0, %v950
    %v952 = vtanh.pop %v932
    %v953 = vmul.f32 %v951, %v829
    %955 = vrot.lane.b32.xlu0 %v952, 64
    %v956 = vpop.permute.xlu0 %955
    %v958 = vmul.f32 %v951, %v956
    %960 = vrot.lane.b32.xlu0 %v958, 32
    %v961 = vpop.permute.xlu0 %960
    %v963 = vadd.f32 %v953, %v961
    %v964 = vtanh.pop %v963
    %966 = vrot.lane.b32.xlu0 %v964, 64
    %v967 = vpop.permute.xlu0 %966
    %v969 = vmul.f32 %v951, %v967
    %v970 = vsel %vm830, %v969, %v828
    %v971 = vsel %vm830, %v963, %v829
    %vm972 = vcmp.gt.s32.totalorder %v59, 6
    %973 = vset.pattern.permute.xlu0 6
    %974 = vperm.xlu0 %973, %v43
    %v975 = vpop.permute.xlu0 %974
    %vm976 = vcmp.eq.s32.totalorder %v975, %v73
    %v977 = vsel %vm976, 1, 0
    %v978 = vcvt.s32.f32 %v977
    %v979 = vpack.c.bf16 %v978, %v978
    %v981 = vsel %vm88, %v979, 0
    %983 = vmatpush.bf16.msra.mxu0 0
    %984 = vmatpush.bf16.msra.mxu0 0
    %985 = vmatpush.bf16.msra.mxu0 0
    %986 = vmatpush.bf16.msra.mxu0 0
    %987 = vmatpush.bf16.msra.mxu0 0
    %988 = vmatpush.bf16.msra.mxu0 0
    %989 = vmatpush.bf16.msra.mxu0 0
    %990 = vmatpush.bf16.msra.mxu0 %v86
    %991 = vmatmul.bf16.gmra.mxu0 %v981
    %v992 = vpop.f32.mrf.mxu0
    %v993 = vadd.f32 %v916, %v992
    %v994 = vpop.f32.mrf.mxu0
    %995 = vdwg.mxu0
    %v996 = vxor.u32 %v993, 2147483648
    %v997 = vmul.f32 %v996, 1.442695
    %v998 = vpow.pop %v997
    %v999 = vadd.f32 %v998, 1.0
    %v1000 = vrcp.pop %v999
    %v1001 = vmul.f32 %v999, %v1000
    %v1002 = vsub.f32 1.0, %v1001
    %v1003 = vmul.f32 %v1000, %v1002
    %v1004 = vadd.f32 %v1000, %v1003
    %vm1005 = vweird.f32 %v999
    %vm1006 = vweird.f32 %v1000
    %vm1007 = vmor %vm1005, %vm1006
    %v1008 = vsel %vm1007, %v1000, %v1004
    %v1009 = vand.u32 2147483647, %v999
    %vm1010 = vcmp.eq.f32.partialorder %v1009, 8.507059e+37
    %v1011 = vand.u32 %v999, 2147483648
    %v1012 = vor.u32 1.1754944e-38, %v1011
    %v1013 = vsel %vm1010, %v1012, %v1008
    %v1014 = vmul.f32 1.0, %v1013
    %v1015 = vtanh.pop %v993
    %v1016 = vmul.f32 %v1014, %v892
    %1018 = vrot.lane.b32.xlu0 %v1015, 64
    %v1019 = vpop.permute.xlu0 %1018
    %v1021 = vmul.f32 %v1014, %v1019
    %1023 = vrot.lane.b32.xlu0 %v1021, 32
    %v1024 = vpop.permute.xlu0 %1023
    %v1026 = vadd.f32 %v1016, %v1024
    %v1027 = vtanh.pop %v1026
    %1029 = vrot.lane.b32.xlu0 %v1027, 64
    %v1030 = vpop.permute.xlu0 %1029
    %v1032 = vmul.f32 %v1014, %v1030
    %v1033 = vsel %vm972, %v1032, %v891
    %v1034 = vsel %vm972, %v1026, %v892
    %1036 = vrot.lane.b32.xlu0 %v1033, 32
    %v1037 = vpop.permute.xlu0 %1036
    %1040 = vrot.lane.b32.xlu0 %v970, 64
    %v1041 = vpop.permute.xlu0 %1040
    %v1043 = vsel %vm148, %v1037, %v1041
    %v1044 = vpack.c.bf16 %v1043, %v1043
    %v1046 = vsel %vm191, %v1044, 0
    %1048 = vmatpush.bf16.msra.mxu0 0
    %1049 = vmatpush.bf16.msra.mxu0 0
    %1050 = vmatpush.bf16.msra.mxu0 0
    %1051 = vmatpush.bf16.msra.mxu0 0
    %1052 = vmatpush.bf16.msra.mxu0 %v181
    %1053 = vmatpush.bf16.msra.mxu0 %v179
    %1054 = vmatpush.bf16.msra.mxu0 %v177
    %1055 = vmatpush.bf16.msra.mxu0 %v175
    %1056 = vmatmul.bf16.gmra.mxu0 %v1046
    %v1057 = vpop.f32.mrf.mxu0
    %v1058 = vadd.f32 0.0, %v1057
    %v1059 = vpop.f32.mrf.mxu0
    %1060 = vdwg.mxu0
    %1061 = vmatpush.bf16.msra.mxu0 0
    %1062 = vmatpush.bf16.msra.mxu0 0
    %1063 = vmatpush.bf16.msra.mxu0 0
    %1064 = vmatpush.bf16.msra.mxu0 0
    %1065 = vmatpush.bf16.msra.mxu0 %v182
    %1066 = vmatpush.bf16.msra.mxu0 %v180
    %1067 = vmatpush.bf16.msra.mxu0 %v178
    %1068 = vmatpush.bf16.msra.mxu0 %v176
    %1069 = vmatmul.bf16.gmra.mxu0 %v1046
    %v1070 = vpop.f32.mrf.mxu0
    %v1071 = vadd.f32 0.0, %v1070
    %v1072 = vpop.f32.mrf.mxu0
    %1073 = vdwg.mxu0
    %v1074 = vadd.f32 %v1071, %v221
    %v1075 = vxor.u32 %v1074, 2147483648
    %v1076 = vmul.f32 %v1075, 1.442695
    %v1077 = vpow.pop %v1076
    %v1078 = vadd.f32 %v1077, 1.0
    %v1079 = vrcp.pop %v1078
    %v1080 = vmul.f32 %v1078, %v1079
    %v1081 = vsub.f32 1.0, %v1080
    %v1082 = vmul.f32 %v1079, %v1081
    %v1083 = vadd.f32 %v1079, %v1082
    %vm1084 = vweird.f32 %v1078
    %vm1085 = vweird.f32 %v1079
    %vm1086 = vmor %vm1084, %vm1085
    %v1087 = vsel %vm1086, %v1079, %v1083
    %v1088 = vand.u32 2147483647, %v1078
    %vm1089 = vcmp.eq.f32.partialorder %v1088, 8.507059e+37
    %v1090 = vand.u32 %v1078, 2147483648
    %v1091 = vor.u32 1.1754944e-38, %v1090
    %v1092 = vsel %vm1089, %v1091, %v1087
    %v1093 = vmul.f32 1.0, %v1092
    %v1094 = vtanh.pop %v1074
    %v1095 = vmul.f32 %v1093, %v971
    %1097 = vrot.lane.b32.xlu0 %v1094, 64
    %v1098 = vpop.permute.xlu0 %1097
    %v1100 = vmul.f32 %v1093, %v1098
    %1102 = vrot.lane.b32.xlu0 %v1100, 32
    %v1103 = vpop.permute.xlu0 %1102
    %v1105 = vadd.f32 %v1095, %v1103
    %v1106 = vtanh.pop %v1105
    %1108 = vrot.lane.b32.xlu0 %v1106, 64
    %v1109 = vpop.permute.xlu0 %1108
    %v1111 = vmul.f32 %v1093, %v1109
    %v1112 = vsel %vm972, %v1111, %v970
    %v1113 = vsel %vm972, %v1105, %v971
    %vm1114 = vcmp.gt.s32.totalorder %v59, 7
    %1115 = vset.pattern.permute.xlu0 7
    %1116 = vperm.xlu0 %1115, %v43
    %v1117 = vpop.permute.xlu0 %1116
    %vm1118 = vcmp.eq.s32.totalorder %v1117, %v73
    %v1119 = vsel %vm1118, 1, 0
    %v1120 = vcvt.s32.f32 %v1119
    %v1121 = vpack.c.bf16 %v1120, %v1120
    %v1123 = vsel %vm88, %v1121, 0
    %1125 = vmatpush.bf16.msra.mxu0 0
    %1126 = vmatpush.bf16.msra.mxu0 0
    %1127 = vmatpush.bf16.msra.mxu0 0
    %1128 = vmatpush.bf16.msra.mxu0 0
    %1129 = vmatpush.bf16.msra.mxu0 0
    %1130 = vmatpush.bf16.msra.mxu0 0
    %1131 = vmatpush.bf16.msra.mxu0 0
    %1132 = vmatpush.bf16.msra.mxu0 %v86
    %1133 = vmatmul.bf16.gmra.mxu0 %v1123
    %v1134 = vpop.f32.mrf.mxu0
    %v1135 = vadd.f32 %v1058, %v1134
    %v1136 = vpop.f32.mrf.mxu0
    %1137 = vdwg.mxu0
    %v1138 = vxor.u32 %v1135, 2147483648
    %v1139 = vmul.f32 %v1138, 1.442695
    %v1140 = vpow.pop %v1139
    %v1141 = vadd.f32 %v1140, 1.0
    %v1142 = vrcp.pop %v1141
    %v1143 = vmul.f32 %v1141, %v1142
    %v1144 = vsub.f32 1.0, %v1143
    %v1145 = vmul.f32 %v1142, %v1144
    %v1146 = vadd.f32 %v1142, %v1145
    %vm1147 = vweird.f32 %v1141
    %vm1148 = vweird.f32 %v1142
    %vm1149 = vmor %vm1147, %vm1148
    %v1150 = vsel %vm1149, %v1142, %v1146
    %v1151 = vand.u32 2147483647, %v1141
    %vm1152 = vcmp.eq.f32.partialorder %v1151, 8.507059e+37
    %v1153 = vand.u32 %v1141, 2147483648
    %v1154 = vor.u32 1.1754944e-38, %v1153
    %v1155 = vsel %vm1152, %v1154, %v1150
    %v1156 = vmul.f32 1.0, %v1155
    %v1157 = vtanh.pop %v1135
    %v1158 = vmul.f32 %v1156, %v1034
    %1160 = vrot.lane.b32.xlu0 %v1157, 64
    %v1161 = vpop.permute.xlu0 %1160
    %v1163 = vmul.f32 %v1156, %v1161
    %1165 = vrot.lane.b32.xlu0 %v1163, 32
    %v1166 = vpop.permute.xlu0 %1165
    %v1168 = vadd.f32 %v1158, %v1166
    %v1169 = vtanh.pop %v1168
    %1171 = vrot.lane.b32.xlu0 %v1169, 64
    %v1172 = vpop.permute.xlu0 %1171
    %v1174 = vmul.f32 %v1156, %v1172
    %v1175 = vsel %vm1114, %v1174, %v1033
    %1177 = vrot.lane.b32.xlu0 %v1175, 32
    %v1178 = vpop.permute.xlu0 %1177
    %1181 = vrot.lane.b32.xlu0 %v1112, 64
    %v1182 = vpop.permute.xlu0 %1181
    %v1184 = vsel %vm148, %v1178, %v1182
    %v1185 = vpack.c.bf16 %v1184, %v1184
    %v1187 = vsel %vm191, %v1185, 0
    %1189 = vmatpush.bf16.msra.mxu0 0
    %1190 = vmatpush.bf16.msra.mxu0 0
    %1191 = vmatpush.bf16.msra.mxu0 0
    %1192 = vmatpush.bf16.msra.mxu0 0
    %1193 = vmatpush.bf16.msra.mxu0 %v182
    %1194 = vmatpush.bf16.msra.mxu0 %v180
    %1195 = vmatpush.bf16.msra.mxu0 %v178
    %1196 = vmatpush.bf16.msra.mxu0 %v176
    %1197 = vmatmul.bf16.gmra.mxu0 %v1187
    %v1198 = vpop.f32.mrf.mxu0
    %v1199 = vadd.f32 0.0, %v1198
    %v1200 = vpop.f32.mrf.mxu0
    %1201 = vdwg.mxu0
    %v1202 = vadd.f32 %v1199, %v221
    %v1203 = vxor.u32 %v1202, 2147483648
    %v1204 = vmul.f32 %v1203, 1.442695
    %v1205 = vpow.pop %v1204
    %v1206 = vadd.f32 %v1205, 1.0
    %v1207 = vrcp.pop %v1206
    %v1208 = vmul.f32 %v1206, %v1207
    %v1209 = vsub.f32 1.0, %v1208
    %v1210 = vmul.f32 %v1207, %v1209
    %v1211 = vadd.f32 %v1207, %v1210
    %vm1212 = vweird.f32 %v1206
    %vm1213 = vweird.f32 %v1207
    %vm1214 = vmor %vm1212, %vm1213
    %v1215 = vsel %vm1214, %v1207, %v1211
    %v1216 = vand.u32 2147483647, %v1206
    %vm1217 = vcmp.eq.f32.partialorder %v1216, 8.507059e+37
    %v1218 = vand.u32 %v1206, 2147483648
    %v1219 = vor.u32 1.1754944e-38, %v1218
    %v1220 = vsel %vm1217, %v1219, %v1215
    %v1221 = vmul.f32 1.0, %v1220
    %v1222 = vtanh.pop %v1202
    %v1223 = vmul.f32 %v1221, %v1113
    %1225 = vrot.lane.b32.xlu0 %v1222, 64
    %v1226 = vpop.permute.xlu0 %1225
    %v1228 = vmul.f32 %v1221, %v1226
    %1230 = vrot.lane.b32.xlu0 %v1228, 32
    %v1231 = vpop.permute.xlu0 %1230
    %v1233 = vadd.f32 %v1223, %v1231
    %v1234 = vtanh.pop %v1233
    %1236 = vrot.lane.b32.xlu0 %v1234, 64
    %v1237 = vpop.permute.xlu0 %1236
    %v1239 = vmul.f32 %v1221, %v1237
    %v1240 = vsel %vm1114, %v1239, %v1112
    %v1241 = vld [vmem:[#allocation5 + $0x50] sm:$0xf]
    %v1242 = vld [vmem:[#allocation5 + $0x58] sm:$0xf]
    %v1243 = vld [vmem:[#allocation5 + $0x60] sm:$0xf]
    %v1244 = vld [vmem:[#allocation5 + $0x68] sm:$0xf]
    %v1245 = vld [vmem:[#allocation5 + $0x70] sm:$0xf]
    %v1246 = vld [vmem:[#allocation5 + $0x78] sm:$0xf]
    %v1247 = vld [vmem:[#allocation5 + $0x80] sm:$0xf]
    %v1248 = vld [vmem:[#allocation5 + $0x88] sm:$0xf]
    %v1249 = vpack.c.bf16 %v1240, %v1240
    %v1250 = vperm.slane %v71, 1
    %1252 = vrot.lane.b32.xlu0 %v1249, 32
    %v1253 = vpop.permute.xlu0 %1252
    %v1258 = vunpack.c.l.b16 %v1241
    %v1259 = vunpack.c.l.b16 %v1242
    %v1260 = vunpack.c.l.b16 %v1243
    %v1261 = vunpack.c.l.b16 %v1244
    %v1262 = vpack.c.b16 %v1259, %v1258
    %v1263 = vpack.c.b16 %v1261, %v1260
    %v1267 = vsel %vm148, %v1253, 0
    %1269 = vmatpush.bf16.msra.mxu0 0
    %1270 = vmatpush.bf16.msra.mxu0 0
    %1271 = vmatpush.bf16.msra.mxu0 0
    %1272 = vmatpush.bf16.msra.mxu0 0
    %1273 = vmatpush.bf16.msra.mxu0 0
    %1274 = vmatpush.bf16.msra.mxu0 0
    %1275 = vmatpush.bf16.msra.mxu0 %v1263
    %1276 = vmatpush.bf16.msra.mxu0 %v1262
    %1277 = vmatmul.bf16.gmra.mxu0 %v1267
    %v1278 = vpop.f32.mrf.mxu0
    %v1279 = vadd.f32 %v1250, %v1278
    %v1280 = vpop.f32.mrf.mxu0
    %1281 = vdwg.mxu0
    %v1282 = vtanh.pop %v1279
    %v1283 = vpack.c.bf16 %v1282, %v1282
    %v1284 = vperm.slane %v71, 2
    %v1289 = vunpack.c.l.b16 %v1245
    %v1290 = vunpack.c.l.b16 %v1246
    %v1291 = vunpack.c.l.b16 %v1247
    %v1292 = vunpack.c.l.b16 %v1248
    %v1293 = vpack.c.b16 %v1290, %v1289
    %v1294 = vpack.c.b16 %v1292, %v1291
    %v1298 = vsel %vm148, %v1283, 0
    %1300 = vmatpush.bf16.msra.mxu0 0
    %1301 = vmatpush.bf16.msra.mxu0 0
    %1302 = vmatpush.bf16.msra.mxu0 0
    %1303 = vmatpush.bf16.msra.mxu0 0
    %1304 = vmatpush.bf16.msra.mxu0 0
    %1305 = vmatpush.bf16.msra.mxu0 0
    %1306 = vmatpush.bf16.msra.mxu0 %v1294
    %1307 = vmatpush.bf16.msra.mxu0 %v1293
    %1308 = vmatmul.bf16.gmra.mxu0 %v1298
    %v1309 = vpop.f32.mrf.mxu0
    %v1310 = vadd.f32 %v1284, %v1309
    %v1311 = vpop.f32.mrf.mxu0
    %1312 = vdwg.mxu0
    %1313 = vst [vmem:[#allocation7] sm:$0x3] %v1310
    // Predicated region
    $region18: #{lstm_acceptor_forward.1} parent=1 // pred_check
      _
    $region19: #{lstm_acceptor_forward.1} parent=1 // pred_check_branch
      %1315 = sbr.rel (0) target = $region21
    $region20: #{lstm_acceptor_forward.1} parent=1 // pred_region
      %1317 = vsyncadd [#allocation4], 0
      %s1319 = sshll.u32 [#allocation7], 4
      %s1320 = int_to_ptr.vmem [resolvable:$true] %s1319
      %s1321 = sshll.u32 %s2, 4
      %s1322 = int_to_ptr.hbm [resolvable:$true] %s1321
      %1324 = dma.vmem_to_hbm [thread:$0]  %s1320, 32, %s1322, [#allocation4]
    $region21: #{lstm_acceptor_forward.1} parent=1 // pred_fallthru
      _
    // Predicated region
    $region22: #{lstm_acceptor_forward.1} parent=1 // pred_check
      _
    $region23: #{lstm_acceptor_forward.1} parent=1 // pred_check_branch
      %1326 = sbr.rel (0) target = $region25
    $region24: #{lstm_acceptor_forward.1} parent=1 // pred_region
      %1328 = dma.done [#allocation4], 32
    $region25: #{lstm_acceptor_forward.1} parent=1 // pred_fallthru
      _
    %1329 = vsyncpa [#allocation3], 1
    %1330 = vsyncpa [#allocation6], 1
    %1331 = vsyncpa [#allocation4], 1

</llo_original>
